<compile_context>
chip_gen: v5e
topology: v5e:2x2
jax: 0.10.0
libtpu: 0.0.40
codegen_flags: <defaults>
</compile_context>

<pallas_src>
import jax
import jax.numpy as jnp
from jax.experimental import pallas as pl
from jax.experimental.pallas import tpu as pltpu

LOOK_BACK = 12      # T
LOOK_FORWARD = 6
INPUT_DIM = 1
HIDDEN_DIM = 20     # H
HIDDEN_PAD = 32     # HP: per-gate padded width (4 * 32 = 128 lanes)
OUTPUT_DIM = 1


def _round_up(x, m):
    return (x + m - 1) // m * m


def lstm_linear_kernel(x_ref, w_ih_ref, w_hh_ref, b_ref, w_lin_ref, b_lin_ref, out_ref):
    """LSTM recurrence + fused final Linear for one batch tile.

    x_ref     : (TB, T)           VMEM  (input squeezed to 2-D, lane-dense-ish)
    w_ih_ref  : (1, 4*HP)         VMEM  (gate-padded, transposed weight_ih_l0)
    w_hh_ref  : (HP, 4*HP)        VMEM  (gate/row-padded, transposed weight_hh_l0)
    b_ref     : (1, 4*HP)         VMEM  (gate-padded bias_ih + bias_hh)
    w_lin_ref : (T, HP, F_out)    VMEM  (per-step slices of transposed linear weight)
    b_lin_ref : (1, F_out)        VMEM
    out_ref   : (TB, F_out)       VMEM
    """
    B, T = x_ref.shape
    HP = w_hh_ref.shape[0]
    F_out = out_ref.shape[1]

    x = x_ref[...]                 # (B, T)      one small tile, reused all steps
    w_ih = w_ih_ref[...]           # (1, 4*HP)
    w_hh = w_hh_ref[...]           # (HP, 4*HP)  MXU RHS, identical across all 12 steps
    b = b_ref[...]                 # (1, 4*HP)

    h = jnp.zeros((B, HP), jnp.float32)
    c = jnp.zeros((B, HP), jnp.float32)
    # Final-Linear bias folded into the accumulator init.
    acc = jnp.zeros((B, F_out), jnp.float32) + b_lin_ref[...]

    # T = 12: static unroll -> one basic block, scheduler sees whole recurrence.
    for t in range(T):
        # Input projection: rank-1 broadcast-mul on the VPU.  No dependence on
        # h/c, so it co-issues with the MXU matmul below (off the serial chain).
        x_proj = x[:, t:t + 1] * w_ih + b                         # (B, 4*HP)
        gates = x_proj + jnp.dot(h, w_hh, preferred_element_type=jnp.float32)
        sg = jax.nn.sigmoid(gates)          # one full-width EUP pass (i, f, o)
        tg = jnp.tanh(gates)                # one full-width EUP pass (g)
        i_g = sg[:, 0 * HP:1 * HP]
        f_g = sg[:, 1 * HP:2 * HP]
        g_g = tg[:, 2 * HP:3 * HP]
        o_g = sg[:, 3 * HP:4 * HP]
        c = f_g * c + i_g * g_g
        h = o_g * jnp.tanh(c)
        # Per-step contribution of h_t to the final Linear (replaces hs concat);
        # slice the weight straight from VMEM instead of keeping it in vregs.
        acc = acc + jnp.dot(h, w_lin_ref[t], preferred_element_type=jnp.float32)

    out_ref[...] = acc


def lstm_model_forward(x, kparams, tile_b=128):
    """x: (B, LOOK_BACK, INPUT_DIM) -> (B, LOOK_FORWARD, OUTPUT_DIM)."""
    w_ih_p, w_hh_p, b_p, w_lin_p, b_lin_p = kparams
    B = x.shape[0]
    f_out = LOOK_FORWARD * OUTPUT_DIM

    # INPUT_DIM == 1: squeeze to (B, T) so the block is a single lane-dense tile.
    x2d = x.reshape(B, LOOK_BACK)

    # Batch tile: multiple of 8, capped at tile_b; pad B so every tile is full.
    tb = min(tile_b, _round_up(B, 8))
    Bp = _round_up(B, tb)
    if Bp != B:
        x2d = jnp.pad(x2d, ((0, Bp - B), (0, 0)))

    out = pl.pallas_call(
        lstm_linear_kernel,
        out_shape=jax.ShapeDtypeStruct((Bp, f_out), jnp.float32),
        grid=(Bp // tb,),
        in_specs=[
            pl.BlockSpec((tb, LOOK_BACK), lambda i: (i, 0)),
            pl.BlockSpec(w_ih_p.shape, lambda i: (0, 0)),
            pl.BlockSpec(w_hh_p.shape, lambda i: (0, 0)),
            pl.BlockSpec(b_p.shape, lambda i: (0, 0)),
            pl.BlockSpec(w_lin_p.shape, lambda i: (0, 0, 0)),
            pl.BlockSpec(b_lin_p.shape, lambda i: (0, 0)),
        ],
        out_specs=pl.BlockSpec((tb, f_out), lambda i: (i, 0)),
        compiler_params=pltpu.CompilerParams(
            dimension_semantics=("parallel",)),
    )(x2d, w_ih_p, w_hh_p, b_p, w_lin_p, b_lin_p)

    return out[:B].reshape(B, LOOK_FORWARD, OUTPUT_DIM)


def init_params(key):
    """Raw parameters with the PyTorch module's shapes (gate order i, f, g, o)."""
    k = jax.random.split(key, 6)
    stdv = 1.0 / (HIDDEN_DIM ** 0.5)

    w_ih = jax.random.uniform(k[0], (4 * HIDDEN_DIM, INPUT_DIM), jnp.float32, -stdv, stdv)
    w_hh = jax.random.uniform(k[1], (4 * HIDDEN_DIM, HIDDEN_DIM), jnp.float32, -stdv, stdv)
    b_ih = jax.random.uniform(k[2], (4 * HIDDEN_DIM,), jnp.float32, -stdv, stdv)
    b_hh = jax.random.uniform(k[3], (4 * HIDDEN_DIM,), jnp.float32, -stdv, stdv)

    in_f = LOOK_BACK * HIDDEN_DIM
    out_f = LOOK_FORWARD * OUTPUT_DIM
    lin_stdv = 1.0 / (in_f ** 0.5)
    w_lin = jax.random.uniform(k[4], (out_f, in_f), jnp.float32, -lin_stdv, lin_stdv)
    b_lin = jax.random.uniform(k[5], (out_f,), jnp.float32, -lin_stdv, lin_stdv)
    return (w_ih, w_hh, b_ih, b_hh, w_lin, b_lin)


def prep_kernel_params(raw):
    """Transpose / fuse / gate-pad raw params into the kernel layout."""
    w_ih, w_hh, b_ih, b_hh, w_lin, b_lin = raw
    H, HP = HIDDEN_DIM, HIDDEN_PAD

    def pad_gate_cols(w):
        # (..., 4H) -> (..., 4*HP); gate k occupies cols [k*HP, k*HP+H), rest zero.
        parts = []
        for g in range(4):
            blk = w[..., g * H:(g + 1) * H]
            pad = [(0, 0)] * (w.ndim - 1) + [(0, HP - H)]
            parts.append(jnp.pad(blk, pad))
        return jnp.concatenate(parts, axis=-1)

    w_ih_p = pad_gate_cols(jnp.transpose(w_ih))                 # (1, 4*HP)
    w_hh_p = pad_gate_cols(jnp.transpose(w_hh))                 # (H, 4*HP)
    w_hh_p = jnp.pad(w_hh_p, ((0, HP - H), (0, 0)))             # (HP, 4*HP)
    b_p = pad_gate_cols((b_ih + b_hh).reshape(1, -1))           # (1, 4*HP)

    f_out = LOOK_FORWARD * OUTPUT_DIM
    w_lin_t = jnp.transpose(w_lin).reshape(LOOK_BACK, H, f_out)  # (T, H, F_out)
    w_lin_p = jnp.pad(w_lin_t, ((0, 0), (0, HP - H), (0, 0)))    # (T, HP, F_out)
    b_lin_p = b_lin.reshape(1, -1)                               # (1, F_out)
    return (w_ih_p, w_hh_p, b_p, w_lin_p, b_lin_p)


def reference_forward(x, raw):
    """Pure-JAX reference matching PyTorch LSTMModel.forward semantics."""
    w_ih, w_hh, b_ih, b_hh, w_lin, b_lin = raw
    B = x.shape[0]
    H = HIDDEN_DIM
    h = jnp.zeros((B, H), jnp.float32)
    c = jnp.zeros((B, H), jnp.float32)
    hs = []
    for t in range(LOOK_BACK):
        gates = x[:, t, :] @ w_ih.T + h @ w_hh.T + b_ih + b_hh
        i_g = jax.nn.sigmoid(gates[:, 0 * H:1 * H])
        f_g = jax.nn.sigmoid(gates[:, 1 * H:2 * H])
        g_g = jnp.tanh(gates[:, 2 * H:3 * H])
        o_g = jax.nn.sigmoid(gates[:, 3 * H:4 * H])
        c = f_g * c + i_g * g_g
        h = o_g * jnp.tanh(c)
        hs.append(h)
    flat = jnp.concatenate(hs, axis=1)
    out = flat @ w_lin.T + b_lin
    return out.reshape(B, LOOK_FORWARD, OUTPUT_DIM)


if __name__ == "__main__":
    key = jax.random.PRNGKey(0)
    k_x, k_p = jax.random.split(key)

    batch = 2
    x = jax.random.normal(k_x, (batch, LOOK_BACK, INPUT_DIM), jnp.float32)
    raw = init_params(k_p)
    kparams = prep_kernel_params(raw)

    y = lstm_model_forward(x, kparams)
    jax.block_until_ready(y)
    assert y.shape == (batch, LOOK_FORWARD, OUTPUT_DIM)

    y_ref = reference_forward(x, raw)
    assert jnp.allclose(y, y_ref, atol=1e-4, rtol=1e-4)
    print("KERNEL_OK")
</pallas_src>

<mosaic_0001>
module attributes {stable_mosaic.version = 11 : i64} {
  func.func @lstm_linear_kernel(%arg0: i32, %arg1: memref<8x12xf32, #tpu.memory_space<vmem>>, %arg2: memref<1x128xf32, #tpu.memory_space<vmem>>, %arg3: memref<32x128xf32, #tpu.memory_space<vmem>>, %arg4: memref<1x128xf32, #tpu.memory_space<vmem>>, %arg5: memref<12x32x6xf32, #tpu.memory_space<vmem>>, %arg6: memref<1x6xf32, #tpu.memory_space<vmem>>, %arg7: memref<8x6xf32, #tpu.memory_space<vmem>>) attributes {dimension_semantics = [#tpu.dimension_semantics<parallel>], iteration_bounds = array<i64: 1>, scalar_prefetch = 0 : i64, scratch_operands = 0 : i64, tpu.core_type = #tpu.core_type<tc>, window_params = [{transform_indices = @transform_0, window_bounds = array<i64: 8, 12>}, {pipeline_mode = #tpu.pipeline_mode<synchronous>, transform_indices = @transform_1, window_bounds = array<i64: 1, 128>}, {pipeline_mode = #tpu.pipeline_mode<synchronous>, transform_indices = @transform_2, window_bounds = array<i64: 32, 128>}, {pipeline_mode = #tpu.pipeline_mode<synchronous>, transform_indices = @transform_3, window_bounds = array<i64: 1, 128>}, {pipeline_mode = #tpu.pipeline_mode<synchronous>, transform_indices = @transform_4, window_bounds = array<i64: 12, 32, 6>}, {pipeline_mode = #tpu.pipeline_mode<synchronous>, transform_indices = @transform_5, window_bounds = array<i64: 1, 6>}, {transform_indices = @transform_6, window_bounds = array<i64: 8, 6>}]} {
    %c0 = arith.constant 0 : index
    %c0_0 = arith.constant 0 : index
    %0 = vector.load %arg1[%c0, %c0_0] : memref<8x12xf32, #tpu.memory_space<vmem>>, vector<8x12xf32>
    %c0_1 = arith.constant 0 : index
    %c0_2 = arith.constant 0 : index
    %1 = vector.load %arg2[%c0_1, %c0_2] : memref<1x128xf32, #tpu.memory_space<vmem>>, vector<1x128xf32>
    %c0_3 = arith.constant 0 : index
    %c0_4 = arith.constant 0 : index
    %2 = vector.load %arg3[%c0_3, %c0_4] : memref<32x128xf32, #tpu.memory_space<vmem>>, vector<32x128xf32>
    %c0_5 = arith.constant 0 : index
    %c0_6 = arith.constant 0 : index
    %3 = vector.load %arg4[%c0_5, %c0_6] : memref<1x128xf32, #tpu.memory_space<vmem>>, vector<1x128xf32>
    %cst = arith.constant 0.000000e+00 : f32
    %4 = vector.broadcast %cst : f32 to vector<8x32xf32>
    %cst_7 = arith.constant 0.000000e+00 : f32
    %5 = vector.broadcast %cst_7 : f32 to vector<8x32xf32>
    %cst_8 = arith.constant 0.000000e+00 : f32
    %6 = vector.broadcast %cst_8 : f32 to vector<8x6xf32>
    %c0_9 = arith.constant 0 : index
    %c0_10 = arith.constant 0 : index
    %7 = vector.load %arg6[%c0_9, %c0_10] : memref<1x6xf32, #tpu.memory_space<vmem>>, vector<1x6xf32>
    %8 = vector.broadcast %7 : vector<1x6xf32> to vector<8x6xf32>
    %9 = arith.addf %6, %8 : vector<8x6xf32>
    %10 = vector.extract_strided_slice %0 {offsets = [0, 0], sizes = [8, 1], strides = [1, 1]} : vector<8x12xf32> to vector<8x1xf32>
    %11 = vector.broadcast %10 : vector<8x1xf32> to vector<8x128xf32>
    %12 = vector.broadcast %1 : vector<1x128xf32> to vector<8x128xf32>
    %13 = arith.mulf %11, %12 : vector<8x128xf32>
    %14 = vector.broadcast %3 : vector<1x128xf32> to vector<8x128xf32>
    %15 = arith.addf %13, %14 : vector<8x128xf32>
    %cst_11 = arith.constant dense<0.000000e+00> : vector<8x128xf32>
    %16 = tpu.matmul %4, %2, %cst_11 {dimension_numbers = #tpu.dot_dimension_numbers<[1], [0], [0], [1], [0, 0, 1, 1], [], []>} : vector<8x32xf32>, vector<32x128xf32>, vector<8x128xf32> -> vector<8x128xf32>
    %17 = arith.addf %15, %16 : vector<8x128xf32>
    %18 = arith.negf %17 : vector<8x128xf32>
    %19 = math.exp %18 : vector<8x128xf32>
    %cst_12 = arith.constant 1.000000e+00 : f32
    %20 = vector.broadcast %cst_12 : f32 to vector<8x128xf32>
    %21 = arith.addf %20, %19 : vector<8x128xf32>
    %22 = arith.divf %20, %21 : vector<8x128xf32>
    %23 = math.tanh %17 : vector<8x128xf32>
    %24 = vector.extract_strided_slice %22 {offsets = [0, 0], sizes = [8, 32], strides = [1, 1]} : vector<8x128xf32> to vector<8x32xf32>
    %25 = vector.extract_strided_slice %22 {offsets = [0, 32], sizes = [8, 32], strides = [1, 1]} : vector<8x128xf32> to vector<8x32xf32>
    %26 = vector.extract_strided_slice %23 {offsets = [0, 64], sizes = [8, 32], strides = [1, 1]} : vector<8x128xf32> to vector<8x32xf32>
    %27 = vector.extract_strided_slice %22 {offsets = [0, 96], sizes = [8, 32], strides = [1, 1]} : vector<8x128xf32> to vector<8x32xf32>
    %28 = arith.mulf %25, %5 : vector<8x32xf32>
    %29 = arith.mulf %24, %26 : vector<8x32xf32>
    %30 = arith.addf %28, %29 : vector<8x32xf32>
    %31 = math.tanh %30 : vector<8x32xf32>
    %32 = arith.mulf %27, %31 : vector<8x32xf32>
    %c0_13 = arith.constant 0 : index
    %c0_14 = arith.constant 0 : index
    %c0_15 = arith.constant 0 : index
    %33 = vector.load %arg5[%c0_13, %c0_14, %c0_15] : memref<12x32x6xf32, #tpu.memory_space<vmem>>, vector<1x32x6xf32>
    %34 = vector.shape_cast %33 : vector<1x32x6xf32> to vector<32x6xf32>
    %cst_16 = arith.constant dense<0.000000e+00> : vector<8x6xf32>
    %35 = tpu.matmul %32, %34, %cst_16 {dimension_numbers = #tpu.dot_dimension_numbers<[1], [0], [0], [1], [0, 0, 1, 1], [], []>} : vector<8x32xf32>, vector<32x6xf32>, vector<8x6xf32> -> vector<8x6xf32>
    %36 = arith.addf %9, %35 : vector<8x6xf32>
    %37 = vector.extract_strided_slice %0 {offsets = [0, 1], sizes = [8, 1], strides = [1, 1]} : vector<8x12xf32> to vector<8x1xf32>
    %38 = vector.broadcast %37 : vector<8x1xf32> to vector<8x128xf32>
    %39 = vector.broadcast %1 : vector<1x128xf32> to vector<8x128xf32>
    %40 = arith.mulf %38, %39 : vector<8x128xf32>
    %41 = vector.broadcast %3 : vector<1x128xf32> to vector<8x128xf32>
    %42 = arith.addf %40, %41 : vector<8x128xf32>
    %cst_17 = arith.constant dense<0.000000e+00> : vector<8x128xf32>
    %43 = tpu.matmul %32, %2, %cst_17 {dimension_numbers = #tpu.dot_dimension_numbers<[1], [0], [0], [1], [0, 0, 1, 1], [], []>} : vector<8x32xf32>, vector<32x128xf32>, vector<8x128xf32> -> vector<8x128xf32>
    %44 = arith.addf %42, %43 : vector<8x128xf32>
    %45 = arith.negf %44 : vector<8x128xf32>
    %46 = math.exp %45 : vector<8x128xf32>
    %cst_18 = arith.constant 1.000000e+00 : f32
    %47 = vector.broadcast %cst_18 : f32 to vector<8x128xf32>
    %48 = arith.addf %47, %46 : vector<8x128xf32>
    %49 = arith.divf %47, %48 : vector<8x128xf32>
    %50 = math.tanh %44 : vector<8x128xf32>
    %51 = vector.extract_strided_slice %49 {offsets = [0, 0], sizes = [8, 32], strides = [1, 1]} : vector<8x128xf32> to vector<8x32xf32>
    %52 = vector.extract_strided_slice %49 {offsets = [0, 32], sizes = [8, 32], strides = [1, 1]} : vector<8x128xf32> to vector<8x32xf32>
    %53 = vector.extract_strided_slice %50 {offsets = [0, 64], sizes = [8, 32], strides = [1, 1]} : vector<8x128xf32> to vector<8x32xf32>
    %54 = vector.extract_strided_slice %49 {offsets = [0, 96], sizes = [8, 32], strides = [1, 1]} : vector<8x128xf32> to vector<8x32xf32>
    %55 = arith.mulf %52, %30 : vector<8x32xf32>
    %56 = arith.mulf %51, %53 : vector<8x32xf32>
    %57 = arith.addf %55, %56 : vector<8x32xf32>
    %58 = math.tanh %57 : vector<8x32xf32>
    %59 = arith.mulf %54, %58 : vector<8x32xf32>
    %c1 = arith.constant 1 : index
    %c0_19 = arith.constant 0 : index
    %c0_20 = arith.constant 0 : index
    %60 = vector.load %arg5[%c1, %c0_19, %c0_20] : memref<12x32x6xf32, #tpu.memory_space<vmem>>, vector<1x32x6xf32>
    %61 = vector.shape_cast %60 : vector<1x32x6xf32> to vector<32x6xf32>
    %cst_21 = arith.constant dense<0.000000e+00> : vector<8x6xf32>
    %62 = tpu.matmul %59, %61, %cst_21 {dimension_numbers = #tpu.dot_dimension_numbers<[1], [0], [0], [1], [0, 0, 1, 1], [], []>} : vector<8x32xf32>, vector<32x6xf32>, vector<8x6xf32> -> vector<8x6xf32>
    %63 = arith.addf %36, %62 : vector<8x6xf32>
    %64 = vector.extract_strided_slice %0 {offsets = [0, 2], sizes = [8, 1], strides = [1, 1]} : vector<8x12xf32> to vector<8x1xf32>
    %65 = vector.broadcast %64 : vector<8x1xf32> to vector<8x128xf32>
    %66 = vector.broadcast %1 : vector<1x128xf32> to vector<8x128xf32>
    %67 = arith.mulf %65, %66 : vector<8x128xf32>
    %68 = vector.broadcast %3 : vector<1x128xf32> to vector<8x128xf32>
    %69 = arith.addf %67, %68 : vector<8x128xf32>
    %cst_22 = arith.constant dense<0.000000e+00> : vector<8x128xf32>
    %70 = tpu.matmul %59, %2, %cst_22 {dimension_numbers = #tpu.dot_dimension_numbers<[1], [0], [0], [1], [0, 0, 1, 1], [], []>} : vector<8x32xf32>, vector<32x128xf32>, vector<8x128xf32> -> vector<8x128xf32>
    %71 = arith.addf %69, %70 : vector<8x128xf32>
    %72 = arith.negf %71 : vector<8x128xf32>
    %73 = math.exp %72 : vector<8x128xf32>
    %cst_23 = arith.constant 1.000000e+00 : f32
    %74 = vector.broadcast %cst_23 : f32 to vector<8x128xf32>
    %75 = arith.addf %74, %73 : vector<8x128xf32>
    %76 = arith.divf %74, %75 : vector<8x128xf32>
    %77 = math.tanh %71 : vector<8x128xf32>
    %78 = vector.extract_strided_slice %76 {offsets = [0, 0], sizes = [8, 32], strides = [1, 1]} : vector<8x128xf32> to vector<8x32xf32>
    %79 = vector.extract_strided_slice %76 {offsets = [0, 32], sizes = [8, 32], strides = [1, 1]} : vector<8x128xf32> to vector<8x32xf32>
    %80 = vector.extract_strided_slice %77 {offsets = [0, 64], sizes = [8, 32], strides = [1, 1]} : vector<8x128xf32> to vector<8x32xf32>
    %81 = vector.extract_strided_slice %76 {offsets = [0, 96], sizes = [8, 32], strides = [1, 1]} : vector<8x128xf32> to vector<8x32xf32>
    %82 = arith.mulf %79, %57 : vector<8x32xf32>
    %83 = arith.mulf %78, %80 : vector<8x32xf32>
    %84 = arith.addf %82, %83 : vector<8x32xf32>
    %85 = math.tanh %84 : vector<8x32xf32>
    %86 = arith.mulf %81, %85 : vector<8x32xf32>
    %c2 = arith.constant 2 : index
    %c0_24 = arith.constant 0 : index
    %c0_25 = arith.constant 0 : index
    %87 = vector.load %arg5[%c2, %c0_24, %c0_25] : memref<12x32x6xf32, #tpu.memory_space<vmem>>, vector<1x32x6xf32>
    %88 = vector.shape_cast %87 : vector<1x32x6xf32> to vector<32x6xf32>
    %cst_26 = arith.constant dense<0.000000e+00> : vector<8x6xf32>
    %89 = tpu.matmul %86, %88, %cst_26 {dimension_numbers = #tpu.dot_dimension_numbers<[1], [0], [0], [1], [0, 0, 1, 1], [], []>} : vector<8x32xf32>, vector<32x6xf32>, vector<8x6xf32> -> vector<8x6xf32>
    %90 = arith.addf %63, %89 : vector<8x6xf32>
    %91 = vector.extract_strided_slice %0 {offsets = [0, 3], sizes = [8, 1], strides = [1, 1]} : vector<8x12xf32> to vector<8x1xf32>
    %92 = vector.broadcast %91 : vector<8x1xf32> to vector<8x128xf32>
    %93 = vector.broadcast %1 : vector<1x128xf32> to vector<8x128xf32>
    %94 = arith.mulf %92, %93 : vector<8x128xf32>
    %95 = vector.broadcast %3 : vector<1x128xf32> to vector<8x128xf32>
    %96 = arith.addf %94, %95 : vector<8x128xf32>
    %cst_27 = arith.constant dense<0.000000e+00> : vector<8x128xf32>
    %97 = tpu.matmul %86, %2, %cst_27 {dimension_numbers = #tpu.dot_dimension_numbers<[1], [0], [0], [1], [0, 0, 1, 1], [], []>} : vector<8x32xf32>, vector<32x128xf32>, vector<8x128xf32> -> vector<8x128xf32>
    %98 = arith.addf %96, %97 : vector<8x128xf32>
    %99 = arith.negf %98 : vector<8x128xf32>
    %100 = math.exp %99 : vector<8x128xf32>
    %cst_28 = arith.constant 1.000000e+00 : f32
    %101 = vector.broadcast %cst_28 : f32 to vector<8x128xf32>
    %102 = arith.addf %101, %100 : vector<8x128xf32>
    %103 = arith.divf %101, %102 : vector<8x128xf32>
    %104 = math.tanh %98 : vector<8x128xf32>
    %105 = vector.extract_strided_slice %103 {offsets = [0, 0], sizes = [8, 32], strides = [1, 1]} : vector<8x128xf32> to vector<8x32xf32>
    %106 = vector.extract_strided_slice %103 {offsets = [0, 32], sizes = [8, 32], strides = [1, 1]} : vector<8x128xf32> to vector<8x32xf32>
    %107 = vector.extract_strided_slice %104 {offsets = [0, 64], sizes = [8, 32], strides = [1, 1]} : vector<8x128xf32> to vector<8x32xf32>
    %108 = vector.extract_strided_slice %103 {offsets = [0, 96], sizes = [8, 32], strides = [1, 1]} : vector<8x128xf32> to vector<8x32xf32>
    %109 = arith.mulf %106, %84 : vector<8x32xf32>
    %110 = arith.mulf %105, %107 : vector<8x32xf32>
    %111 = arith.addf %109, %110 : vector<8x32xf32>
    %112 = math.tanh %111 : vector<8x32xf32>
    %113 = arith.mulf %108, %112 : vector<8x32xf32>
    %c3 = arith.constant 3 : index
    %c0_29 = arith.constant 0 : index
    %c0_30 = arith.constant 0 : index
    %114 = vector.load %arg5[%c3, %c0_29, %c0_30] : memref<12x32x6xf32, #tpu.memory_space<vmem>>, vector<1x32x6xf32>
    %115 = vector.shape_cast %114 : vector<1x32x6xf32> to vector<32x6xf32>
    %cst_31 = arith.constant dense<0.000000e+00> : vector<8x6xf32>
    %116 = tpu.matmul %113, %115, %cst_31 {dimension_numbers = #tpu.dot_dimension_numbers<[1], [0], [0], [1], [0, 0, 1, 1], [], []>} : vector<8x32xf32>, vector<32x6xf32>, vector<8x6xf32> -> vector<8x6xf32>
    %117 = arith.addf %90, %116 : vector<8x6xf32>
    %118 = vector.extract_strided_slice %0 {offsets = [0, 4], sizes = [8, 1], strides = [1, 1]} : vector<8x12xf32> to vector<8x1xf32>
    %119 = vector.broadcast %118 : vector<8x1xf32> to vector<8x128xf32>
    %120 = vector.broadcast %1 : vector<1x128xf32> to vector<8x128xf32>
    %121 = arith.mulf %119, %120 : vector<8x128xf32>
    %122 = vector.broadcast %3 : vector<1x128xf32> to vector<8x128xf32>
    %123 = arith.addf %121, %122 : vector<8x128xf32>
    %cst_32 = arith.constant dense<0.000000e+00> : vector<8x128xf32>
    %124 = tpu.matmul %113, %2, %cst_32 {dimension_numbers = #tpu.dot_dimension_numbers<[1], [0], [0], [1], [0, 0, 1, 1], [], []>} : vector<8x32xf32>, vector<32x128xf32>, vector<8x128xf32> -> vector<8x128xf32>
    %125 = arith.addf %123, %124 : vector<8x128xf32>
    %126 = arith.negf %125 : vector<8x128xf32>
    %127 = math.exp %126 : vector<8x128xf32>
    %cst_33 = arith.constant 1.000000e+00 : f32
    %128 = vector.broadcast %cst_33 : f32 to vector<8x128xf32>
    %129 = arith.addf %128, %127 : vector<8x128xf32>
    %130 = arith.divf %128, %129 : vector<8x128xf32>
    %131 = math.tanh %125 : vector<8x128xf32>
    %132 = vector.extract_strided_slice %130 {offsets = [0, 0], sizes = [8, 32], strides = [1, 1]} : vector<8x128xf32> to vector<8x32xf32>
    %133 = vector.extract_strided_slice %130 {offsets = [0, 32], sizes = [8, 32], strides = [1, 1]} : vector<8x128xf32> to vector<8x32xf32>
    %134 = vector.extract_strided_slice %131 {offsets = [0, 64], sizes = [8, 32], strides = [1, 1]} : vector<8x128xf32> to vector<8x32xf32>
    %135 = vector.extract_strided_slice %130 {offsets = [0, 96], sizes = [8, 32], strides = [1, 1]} : vector<8x128xf32> to vector<8x32xf32>
    %136 = arith.mulf %133, %111 : vector<8x32xf32>
    %137 = arith.mulf %132, %134 : vector<8x32xf32>
    %138 = arith.addf %136, %137 : vector<8x32xf32>
    %139 = math.tanh %138 : vector<8x32xf32>
    %140 = arith.mulf %135, %139 : vector<8x32xf32>
    %c4 = arith.constant 4 : index
    %c0_34 = arith.constant 0 : index
    %c0_35 = arith.constant 0 : index
    %141 = vector.load %arg5[%c4, %c0_34, %c0_35] : memref<12x32x6xf32, #tpu.memory_space<vmem>>, vector<1x32x6xf32>
    %142 = vector.shape_cast %141 : vector<1x32x6xf32> to vector<32x6xf32>
    %cst_36 = arith.constant dense<0.000000e+00> : vector<8x6xf32>
    %143 = tpu.matmul %140, %142, %cst_36 {dimension_numbers = #tpu.dot_dimension_numbers<[1], [0], [0], [1], [0, 0, 1, 1], [], []>} : vector<8x32xf32>, vector<32x6xf32>, vector<8x6xf32> -> vector<8x6xf32>
    %144 = arith.addf %117, %143 : vector<8x6xf32>
    %145 = vector.extract_strided_slice %0 {offsets = [0, 5], sizes = [8, 1], strides = [1, 1]} : vector<8x12xf32> to vector<8x1xf32>
    %146 = vector.broadcast %145 : vector<8x1xf32> to vector<8x128xf32>
    %147 = vector.broadcast %1 : vector<1x128xf32> to vector<8x128xf32>
    %148 = arith.mulf %146, %147 : vector<8x128xf32>
    %149 = vector.broadcast %3 : vector<1x128xf32> to vector<8x128xf32>
    %150 = arith.addf %148, %149 : vector<8x128xf32>
    %cst_37 = arith.constant dense<0.000000e+00> : vector<8x128xf32>
    %151 = tpu.matmul %140, %2, %cst_37 {dimension_numbers = #tpu.dot_dimension_numbers<[1], [0], [0], [1], [0, 0, 1, 1], [], []>} : vector<8x32xf32>, vector<32x128xf32>, vector<8x128xf32> -> vector<8x128xf32>
    %152 = arith.addf %150, %151 : vector<8x128xf32>
    %153 = arith.negf %152 : vector<8x128xf32>
    %154 = math.exp %153 : vector<8x128xf32>
    %cst_38 = arith.constant 1.000000e+00 : f32
    %155 = vector.broadcast %cst_38 : f32 to vector<8x128xf32>
    %156 = arith.addf %155, %154 : vector<8x128xf32>
    %157 = arith.divf %155, %156 : vector<8x128xf32>
    %158 = math.tanh %152 : vector<8x128xf32>
    %159 = vector.extract_strided_slice %157 {offsets = [0, 0], sizes = [8, 32], strides = [1, 1]} : vector<8x128xf32> to vector<8x32xf32>
    %160 = vector.extract_strided_slice %157 {offsets = [0, 32], sizes = [8, 32], strides = [1, 1]} : vector<8x128xf32> to vector<8x32xf32>
    %161 = vector.extract_strided_slice %158 {offsets = [0, 64], sizes = [8, 32], strides = [1, 1]} : vector<8x128xf32> to vector<8x32xf32>
    %162 = vector.extract_strided_slice %157 {offsets = [0, 96], sizes = [8, 32], strides = [1, 1]} : vector<8x128xf32> to vector<8x32xf32>
    %163 = arith.mulf %160, %138 : vector<8x32xf32>
    %164 = arith.mulf %159, %161 : vector<8x32xf32>
    %165 = arith.addf %163, %164 : vector<8x32xf32>
    %166 = math.tanh %165 : vector<8x32xf32>
    %167 = arith.mulf %162, %166 : vector<8x32xf32>
    %c5 = arith.constant 5 : index
    %c0_39 = arith.constant 0 : index
    %c0_40 = arith.constant 0 : index
    %168 = vector.load %arg5[%c5, %c0_39, %c0_40] : memref<12x32x6xf32, #tpu.memory_space<vmem>>, vector<1x32x6xf32>
    %169 = vector.shape_cast %168 : vector<1x32x6xf32> to vector<32x6xf32>
    %cst_41 = arith.constant dense<0.000000e+00> : vector<8x6xf32>
    %170 = tpu.matmul %167, %169, %cst_41 {dimension_numbers = #tpu.dot_dimension_numbers<[1], [0], [0], [1], [0, 0, 1, 1], [], []>} : vector<8x32xf32>, vector<32x6xf32>, vector<8x6xf32> -> vector<8x6xf32>
    %171 = arith.addf %144, %170 : vector<8x6xf32>
    %172 = vector.extract_strided_slice %0 {offsets = [0, 6], sizes = [8, 1], strides = [1, 1]} : vector<8x12xf32> to vector<8x1xf32>
    %173 = vector.broadcast %172 : vector<8x1xf32> to vector<8x128xf32>
    %174 = vector.broadcast %1 : vector<1x128xf32> to vector<8x128xf32>
    %175 = arith.mulf %173, %174 : vector<8x128xf32>
    %176 = vector.broadcast %3 : vector<1x128xf32> to vector<8x128xf32>
    %177 = arith.addf %175, %176 : vector<8x128xf32>
    %cst_42 = arith.constant dense<0.000000e+00> : vector<8x128xf32>
    %178 = tpu.matmul %167, %2, %cst_42 {dimension_numbers = #tpu.dot_dimension_numbers<[1], [0], [0], [1], [0, 0, 1, 1], [], []>} : vector<8x32xf32>, vector<32x128xf32>, vector<8x128xf32> -> vector<8x128xf32>
    %179 = arith.addf %177, %178 : vector<8x128xf32>
    %180 = arith.negf %179 : vector<8x128xf32>
    %181 = math.exp %180 : vector<8x128xf32>
    %cst_43 = arith.constant 1.000000e+00 : f32
    %182 = vector.broadcast %cst_43 : f32 to vector<8x128xf32>
    %183 = arith.addf %182, %181 : vector<8x128xf32>
    %184 = arith.divf %182, %183 : vector<8x128xf32>
    %185 = math.tanh %179 : vector<8x128xf32>
    %186 = vector.extract_strided_slice %184 {offsets = [0, 0], sizes = [8, 32], strides = [1, 1]} : vector<8x128xf32> to vector<8x32xf32>
    %187 = vector.extract_strided_slice %184 {offsets = [0, 32], sizes = [8, 32], strides = [1, 1]} : vector<8x128xf32> to vector<8x32xf32>
    %188 = vector.extract_strided_slice %185 {offsets = [0, 64], sizes = [8, 32], strides = [1, 1]} : vector<8x128xf32> to vector<8x32xf32>
    %189 = vector.extract_strided_slice %184 {offsets = [0, 96], sizes = [8, 32], strides = [1, 1]} : vector<8x128xf32> to vector<8x32xf32>
    %190 = arith.mulf %187, %165 : vector<8x32xf32>
    %191 = arith.mulf %186, %188 : vector<8x32xf32>
    %192 = arith.addf %190, %191 : vector<8x32xf32>
    %193 = math.tanh %192 : vector<8x32xf32>
    %194 = arith.mulf %189, %193 : vector<8x32xf32>
    %c6 = arith.constant 6 : index
    %c0_44 = arith.constant 0 : index
    %c0_45 = arith.constant 0 : index
    %195 = vector.load %arg5[%c6, %c0_44, %c0_45] : memref<12x32x6xf32, #tpu.memory_space<vmem>>, vector<1x32x6xf32>
    %196 = vector.shape_cast %195 : vector<1x32x6xf32> to vector<32x6xf32>
    %cst_46 = arith.constant dense<0.000000e+00> : vector<8x6xf32>
    %197 = tpu.matmul %194, %196, %cst_46 {dimension_numbers = #tpu.dot_dimension_numbers<[1], [0], [0], [1], [0, 0, 1, 1], [], []>} : vector<8x32xf32>, vector<32x6xf32>, vector<8x6xf32> -> vector<8x6xf32>
    %198 = arith.addf %171, %197 : vector<8x6xf32>
    %199 = vector.extract_strided_slice %0 {offsets = [0, 7], sizes = [8, 1], strides = [1, 1]} : vector<8x12xf32> to vector<8x1xf32>
    %200 = vector.broadcast %199 : vector<8x1xf32> to vector<8x128xf32>
    %201 = vector.broadcast %1 : vector<1x128xf32> to vector<8x128xf32>
    %202 = arith.mulf %200, %201 : vector<8x128xf32>
    %203 = vector.broadcast %3 : vector<1x128xf32> to vector<8x128xf32>
    %204 = arith.addf %202, %203 : vector<8x128xf32>
    %cst_47 = arith.constant dense<0.000000e+00> : vector<8x128xf32>
    %205 = tpu.matmul %194, %2, %cst_47 {dimension_numbers = #tpu.dot_dimension_numbers<[1], [0], [0], [1], [0, 0, 1, 1], [], []>} : vector<8x32xf32>, vector<32x128xf32>, vector<8x128xf32> -> vector<8x128xf32>
    %206 = arith.addf %204, %205 : vector<8x128xf32>
    %207 = arith.negf %206 : vector<8x128xf32>
    %208 = math.exp %207 : vector<8x128xf32>
    %cst_48 = arith.constant 1.000000e+00 : f32
    %209 = vector.broadcast %cst_48 : f32 to vector<8x128xf32>
    %210 = arith.addf %209, %208 : vector<8x128xf32>
    %211 = arith.divf %209, %210 : vector<8x128xf32>
    %212 = math.tanh %206 : vector<8x128xf32>
    %213 = vector.extract_strided_slice %211 {offsets = [0, 0], sizes = [8, 32], strides = [1, 1]} : vector<8x128xf32> to vector<8x32xf32>
    %214 = vector.extract_strided_slice %211 {offsets = [0, 32], sizes = [8, 32], strides = [1, 1]} : vector<8x128xf32> to vector<8x32xf32>
    %215 = vector.extract_strided_slice %212 {offsets = [0, 64], sizes = [8, 32], strides = [1, 1]} : vector<8x128xf32> to vector<8x32xf32>
    %216 = vector.extract_strided_slice %211 {offsets = [0, 96], sizes = [8, 32], strides = [1, 1]} : vector<8x128xf32> to vector<8x32xf32>
    %217 = arith.mulf %214, %192 : vector<8x32xf32>
    %218 = arith.mulf %213, %215 : vector<8x32xf32>
    %219 = arith.addf %217, %218 : vector<8x32xf32>
    %220 = math.tanh %219 : vector<8x32xf32>
    %221 = arith.mulf %216, %220 : vector<8x32xf32>
    %c7 = arith.constant 7 : index
    %c0_49 = arith.constant 0 : index
    %c0_50 = arith.constant 0 : index
    %222 = vector.load %arg5[%c7, %c0_49, %c0_50] : memref<12x32x6xf32, #tpu.memory_space<vmem>>, vector<1x32x6xf32>
    %223 = vector.shape_cast %222 : vector<1x32x6xf32> to vector<32x6xf32>
    %cst_51 = arith.constant dense<0.000000e+00> : vector<8x6xf32>
    %224 = tpu.matmul %221, %223, %cst_51 {dimension_numbers = #tpu.dot_dimension_numbers<[1], [0], [0], [1], [0, 0, 1, 1], [], []>} : vector<8x32xf32>, vector<32x6xf32>, vector<8x6xf32> -> vector<8x6xf32>
    %225 = arith.addf %198, %224 : vector<8x6xf32>
    %226 = vector.extract_strided_slice %0 {offsets = [0, 8], sizes = [8, 1], strides = [1, 1]} : vector<8x12xf32> to vector<8x1xf32>
    %227 = vector.broadcast %226 : vector<8x1xf32> to vector<8x128xf32>
    %228 = vector.broadcast %1 : vector<1x128xf32> to vector<8x128xf32>
    %229 = arith.mulf %227, %228 : vector<8x128xf32>
    %230 = vector.broadcast %3 : vector<1x128xf32> to vector<8x128xf32>
    %231 = arith.addf %229, %230 : vector<8x128xf32>
    %cst_52 = arith.constant dense<0.000000e+00> : vector<8x128xf32>
    %232 = tpu.matmul %221, %2, %cst_52 {dimension_numbers = #tpu.dot_dimension_numbers<[1], [0], [0], [1], [0, 0, 1, 1], [], []>} : vector<8x32xf32>, vector<32x128xf32>, vector<8x128xf32> -> vector<8x128xf32>
    %233 = arith.addf %231, %232 : vector<8x128xf32>
    %234 = arith.negf %233 : vector<8x128xf32>
    %235 = math.exp %234 : vector<8x128xf32>
    %cst_53 = arith.constant 1.000000e+00 : f32
    %236 = vector.broadcast %cst_53 : f32 to vector<8x128xf32>
    %237 = arith.addf %236, %235 : vector<8x128xf32>
    %238 = arith.divf %236, %237 : vector<8x128xf32>
    %239 = math.tanh %233 : vector<8x128xf32>
    %240 = vector.extract_strided_slice %238 {offsets = [0, 0], sizes = [8, 32], strides = [1, 1]} : vector<8x128xf32> to vector<8x32xf32>
    %241 = vector.extract_strided_slice %238 {offsets = [0, 32], sizes = [8, 32], strides = [1, 1]} : vector<8x128xf32> to vector<8x32xf32>
    %242 = vector.extract_strided_slice %239 {offsets = [0, 64], sizes = [8, 32], strides = [1, 1]} : vector<8x128xf32> to vector<8x32xf32>
    %243 = vector.extract_strided_slice %238 {offsets = [0, 96], sizes = [8, 32], strides = [1, 1]} : vector<8x128xf32> to vector<8x32xf32>
    %244 = arith.mulf %241, %219 : vector<8x32xf32>
    %245 = arith.mulf %240, %242 : vector<8x32xf32>
    %246 = arith.addf %244, %245 : vector<8x32xf32>
    %247 = math.tanh %246 : vector<8x32xf32>
    %248 = arith.mulf %243, %247 : vector<8x32xf32>
    %c8 = arith.constant 8 : index
    %c0_54 = arith.constant 0 : index
    %c0_55 = arith.constant 0 : index
    %249 = vector.load %arg5[%c8, %c0_54, %c0_55] : memref<12x32x6xf32, #tpu.memory_space<vmem>>, vector<1x32x6xf32>
    %250 = vector.shape_cast %249 : vector<1x32x6xf32> to vector<32x6xf32>
    %cst_56 = arith.constant dense<0.000000e+00> : vector<8x6xf32>
    %251 = tpu.matmul %248, %250, %cst_56 {dimension_numbers = #tpu.dot_dimension_numbers<[1], [0], [0], [1], [0, 0, 1, 1], [], []>} : vector<8x32xf32>, vector<32x6xf32>, vector<8x6xf32> -> vector<8x6xf32>
    %252 = arith.addf %225, %251 : vector<8x6xf32>
    %253 = vector.extract_strided_slice %0 {offsets = [0, 9], sizes = [8, 1], strides = [1, 1]} : vector<8x12xf32> to vector<8x1xf32>
    %254 = vector.broadcast %253 : vector<8x1xf32> to vector<8x128xf32>
    %255 = vector.broadcast %1 : vector<1x128xf32> to vector<8x128xf32>
    %256 = arith.mulf %254, %255 : vector<8x128xf32>
    %257 = vector.broadcast %3 : vector<1x128xf32> to vector<8x128xf32>
    %258 = arith.addf %256, %257 : vector<8x128xf32>
    %cst_57 = arith.constant dense<0.000000e+00> : vector<8x128xf32>
    %259 = tpu.matmul %248, %2, %cst_57 {dimension_numbers = #tpu.dot_dimension_numbers<[1], [0], [0], [1], [0, 0, 1, 1], [], []>} : vector<8x32xf32>, vector<32x128xf32>, vector<8x128xf32> -> vector<8x128xf32>
    %260 = arith.addf %258, %259 : vector<8x128xf32>
    %261 = arith.negf %260 : vector<8x128xf32>
    %262 = math.exp %261 : vector<8x128xf32>
    %cst_58 = arith.constant 1.000000e+00 : f32
    %263 = vector.broadcast %cst_58 : f32 to vector<8x128xf32>
    %264 = arith.addf %263, %262 : vector<8x128xf32>
    %265 = arith.divf %263, %264 : vector<8x128xf32>
    %266 = math.tanh %260 : vector<8x128xf32>
    %267 = vector.extract_strided_slice %265 {offsets = [0, 0], sizes = [8, 32], strides = [1, 1]} : vector<8x128xf32> to vector<8x32xf32>
    %268 = vector.extract_strided_slice %265 {offsets = [0, 32], sizes = [8, 32], strides = [1, 1]} : vector<8x128xf32> to vector<8x32xf32>
    %269 = vector.extract_strided_slice %266 {offsets = [0, 64], sizes = [8, 32], strides = [1, 1]} : vector<8x128xf32> to vector<8x32xf32>
    %270 = vector.extract_strided_slice %265 {offsets = [0, 96], sizes = [8, 32], strides = [1, 1]} : vector<8x128xf32> to vector<8x32xf32>
    %271 = arith.mulf %268, %246 : vector<8x32xf32>
    %272 = arith.mulf %267, %269 : vector<8x32xf32>
    %273 = arith.addf %271, %272 : vector<8x32xf32>
    %274 = math.tanh %273 : vector<8x32xf32>
    %275 = arith.mulf %270, %274 : vector<8x32xf32>
    %c9 = arith.constant 9 : index
    %c0_59 = arith.constant 0 : index
    %c0_60 = arith.constant 0 : index
    %276 = vector.load %arg5[%c9, %c0_59, %c0_60] : memref<12x32x6xf32, #tpu.memory_space<vmem>>, vector<1x32x6xf32>
    %277 = vector.shape_cast %276 : vector<1x32x6xf32> to vector<32x6xf32>
    %cst_61 = arith.constant dense<0.000000e+00> : vector<8x6xf32>
    %278 = tpu.matmul %275, %277, %cst_61 {dimension_numbers = #tpu.dot_dimension_numbers<[1], [0], [0], [1], [0, 0, 1, 1], [], []>} : vector<8x32xf32>, vector<32x6xf32>, vector<8x6xf32> -> vector<8x6xf32>
    %279 = arith.addf %252, %278 : vector<8x6xf32>
    %280 = vector.extract_strided_slice %0 {offsets = [0, 10], sizes = [8, 1], strides = [1, 1]} : vector<8x12xf32> to vector<8x1xf32>
    %281 = vector.broadcast %280 : vector<8x1xf32> to vector<8x128xf32>
    %282 = vector.broadcast %1 : vector<1x128xf32> to vector<8x128xf32>
    %283 = arith.mulf %281, %282 : vector<8x128xf32>
    %284 = vector.broadcast %3 : vector<1x128xf32> to vector<8x128xf32>
    %285 = arith.addf %283, %284 : vector<8x128xf32>
    %cst_62 = arith.constant dense<0.000000e+00> : vector<8x128xf32>
    %286 = tpu.matmul %275, %2, %cst_62 {dimension_numbers = #tpu.dot_dimension_numbers<[1], [0], [0], [1], [0, 0, 1, 1], [], []>} : vector<8x32xf32>, vector<32x128xf32>, vector<8x128xf32> -> vector<8x128xf32>
    %287 = arith.addf %285, %286 : vector<8x128xf32>
    %288 = arith.negf %287 : vector<8x128xf32>
    %289 = math.exp %288 : vector<8x128xf32>
    %cst_63 = arith.constant 1.000000e+00 : f32
    %290 = vector.broadcast %cst_63 : f32 to vector<8x128xf32>
    %291 = arith.addf %290, %289 : vector<8x128xf32>
    %292 = arith.divf %290, %291 : vector<8x128xf32>
    %293 = math.tanh %287 : vector<8x128xf32>
    %294 = vector.extract_strided_slice %292 {offsets = [0, 0], sizes = [8, 32], strides = [1, 1]} : vector<8x128xf32> to vector<8x32xf32>
    %295 = vector.extract_strided_slice %292 {offsets = [0, 32], sizes = [8, 32], strides = [1, 1]} : vector<8x128xf32> to vector<8x32xf32>
    %296 = vector.extract_strided_slice %293 {offsets = [0, 64], sizes = [8, 32], strides = [1, 1]} : vector<8x128xf32> to vector<8x32xf32>
    %297 = vector.extract_strided_slice %292 {offsets = [0, 96], sizes = [8, 32], strides = [1, 1]} : vector<8x128xf32> to vector<8x32xf32>
    %298 = arith.mulf %295, %273 : vector<8x32xf32>
    %299 = arith.mulf %294, %296 : vector<8x32xf32>
    %300 = arith.addf %298, %299 : vector<8x32xf32>
    %301 = math.tanh %300 : vector<8x32xf32>
    %302 = arith.mulf %297, %301 : vector<8x32xf32>
    %c10 = arith.constant 10 : index
    %c0_64 = arith.constant 0 : index
    %c0_65 = arith.constant 0 : index
    %303 = vector.load %arg5[%c10, %c0_64, %c0_65] : memref<12x32x6xf32, #tpu.memory_space<vmem>>, vector<1x32x6xf32>
    %304 = vector.shape_cast %303 : vector<1x32x6xf32> to vector<32x6xf32>
    %cst_66 = arith.constant dense<0.000000e+00> : vector<8x6xf32>
    %305 = tpu.matmul %302, %304, %cst_66 {dimension_numbers = #tpu.dot_dimension_numbers<[1], [0], [0], [1], [0, 0, 1, 1], [], []>} : vector<8x32xf32>, vector<32x6xf32>, vector<8x6xf32> -> vector<8x6xf32>
    %306 = arith.addf %279, %305 : vector<8x6xf32>
    %307 = vector.extract_strided_slice %0 {offsets = [0, 11], sizes = [8, 1], strides = [1, 1]} : vector<8x12xf32> to vector<8x1xf32>
    %308 = vector.broadcast %307 : vector<8x1xf32> to vector<8x128xf32>
    %309 = vector.broadcast %1 : vector<1x128xf32> to vector<8x128xf32>
    %310 = arith.mulf %308, %309 : vector<8x128xf32>
    %311 = vector.broadcast %3 : vector<1x128xf32> to vector<8x128xf32>
    %312 = arith.addf %310, %311 : vector<8x128xf32>
    %cst_67 = arith.constant dense<0.000000e+00> : vector<8x128xf32>
    %313 = tpu.matmul %302, %2, %cst_67 {dimension_numbers = #tpu.dot_dimension_numbers<[1], [0], [0], [1], [0, 0, 1, 1], [], []>} : vector<8x32xf32>, vector<32x128xf32>, vector<8x128xf32> -> vector<8x128xf32>
    %314 = arith.addf %312, %313 : vector<8x128xf32>
    %315 = arith.negf %314 : vector<8x128xf32>
    %316 = math.exp %315 : vector<8x128xf32>
    %cst_68 = arith.constant 1.000000e+00 : f32
    %317 = vector.broadcast %cst_68 : f32 to vector<8x128xf32>
    %318 = arith.addf %317, %316 : vector<8x128xf32>
    %319 = arith.divf %317, %318 : vector<8x128xf32>
    %320 = math.tanh %314 : vector<8x128xf32>
    %321 = vector.extract_strided_slice %319 {offsets = [0, 0], sizes = [8, 32], strides = [1, 1]} : vector<8x128xf32> to vector<8x32xf32>
    %322 = vector.extract_strided_slice %319 {offsets = [0, 32], sizes = [8, 32], strides = [1, 1]} : vector<8x128xf32> to vector<8x32xf32>
    %323 = vector.extract_strided_slice %320 {offsets = [0, 64], sizes = [8, 32], strides = [1, 1]} : vector<8x128xf32> to vector<8x32xf32>
    %324 = vector.extract_strided_slice %319 {offsets = [0, 96], sizes = [8, 32], strides = [1, 1]} : vector<8x128xf32> to vector<8x32xf32>
    %325 = arith.mulf %322, %300 : vector<8x32xf32>
    %326 = arith.mulf %321, %323 : vector<8x32xf32>
    %327 = arith.addf %325, %326 : vector<8x32xf32>
    %328 = math.tanh %327 : vector<8x32xf32>
    %329 = arith.mulf %324, %328 : vector<8x32xf32>
    %c11 = arith.constant 11 : index
    %c0_69 = arith.constant 0 : index
    %c0_70 = arith.constant 0 : index
    %330 = vector.load %arg5[%c11, %c0_69, %c0_70] : memref<12x32x6xf32, #tpu.memory_space<vmem>>, vector<1x32x6xf32>
    %331 = vector.shape_cast %330 : vector<1x32x6xf32> to vector<32x6xf32>
    %cst_71 = arith.constant dense<0.000000e+00> : vector<8x6xf32>
    %332 = tpu.matmul %329, %331, %cst_71 {dimension_numbers = #tpu.dot_dimension_numbers<[1], [0], [0], [1], [0, 0, 1, 1], [], []>} : vector<8x32xf32>, vector<32x6xf32>, vector<8x6xf32> -> vector<8x6xf32>
    %333 = arith.addf %306, %332 : vector<8x6xf32>
    %c0_72 = arith.constant 0 : index
    %c0_73 = arith.constant 0 : index
    %334 = vector.load %arg7[%c0_72, %c0_73] : memref<8x6xf32, #tpu.memory_space<vmem>>, vector<8x6xf32>
    tpu.vector_store %arg7[%c0_72, %c0_73], %333 {strides = array<i32>} : memref<8x6xf32, #tpu.memory_space<vmem>>, vector<8x6xf32>,
    return
  }
  func.func @transform_0(%arg0: i32) -> (i32, i32) {
    %c0_i32 = arith.constant 0 : i32
    %c0_i32_0 = arith.constant 0 : i32
    return %arg0, %c0_i32 : i32, i32
  }
  func.func @transform_1(%arg0: i32) -> (i32, i32) {
    %c0_i32 = arith.constant 0 : i32
    %c0_i32_0 = arith.constant 0 : i32
    %c0_i32_1 = arith.constant 0 : i32
    return %c0_i32, %c0_i32_0 : i32, i32
  }
  func.func @transform_2(%arg0: i32) -> (i32, i32) {
    %c0_i32 = arith.constant 0 : i32
    %c0_i32_0 = arith.constant 0 : i32
    %c0_i32_1 = arith.constant 0 : i32
    return %c0_i32, %c0_i32_0 : i32, i32
  }
  func.func @transform_3(%arg0: i32) -> (i32, i32) {
    %c0_i32 = arith.constant 0 : i32
    %c0_i32_0 = arith.constant 0 : i32
    %c0_i32_1 = arith.constant 0 : i32
    return %c0_i32, %c0_i32_0 : i32, i32
  }
  func.func @transform_4(%arg0: i32) -> (i32, i32, i32) {
    %c0_i32 = arith.constant 0 : i32
    %c0_i32_0 = arith.constant 0 : i32
    %c0_i32_1 = arith.constant 0 : i32
    %c0_i32_2 = arith.constant 0 : i32
    return %c0_i32, %c0_i32_0, %c0_i32_1 : i32, i32, i32
  }
  func.func @transform_5(%arg0: i32) -> (i32, i32) {
    %c0_i32 = arith.constant 0 : i32
    %c0_i32_0 = arith.constant 0 : i32
    %c0_i32_1 = arith.constant 0 : i32
    return %c0_i32, %c0_i32_0 : i32, i32
  }
  func.func @transform_6(%arg0: i32) -> (i32, i32) {
    %c0_i32 = arith.constant 0 : i32
    %c0_i32_0 = arith.constant 0 : i32
    return %arg0, %c0_i32 : i32, i32
  }
}

</mosaic_0001>

<llo_original>
// kernel: tpu_custom_call.1
$region0: #{tpu_custom_call.1}
  #allocation0 [shape = 'u32[]', space=smem, size = 0x4, offset = 0x4, fixed_abs, tag = 'smem constant byte address 0x4 - core index']
  #allocation1 [shape = 'u32[72,128]{1,0:T(1,128)}', space=vmem, size = 0x9000, scoped, tag = 'internal scratch']
  %s0 = inlined_call_operand.vmem [shape: f32[8,12], index: 0, kind: input, shape index: {}]
  %s1 = inlined_call_operand.vmem [shape: f32[1,128], index: 1, kind: input, shape index: {}]
  %s2 = inlined_call_operand.vmem [shape: f32[32,128], index: 2, kind: input, shape index: {}]
  %s3 = inlined_call_operand.vmem [shape: f32[1,128], index: 3, kind: input, shape index: {}]
  %s4 = inlined_call_operand.vmem [shape: f32[12,32,6], index: 4, kind: input, shape index: {}]
  %s5 = inlined_call_operand.vmem [shape: f32[1,6], index: 5, kind: input, shape index: {}]
  %s6 = inlined_call_operand.hbm [shape: f32[8,6], index: 6, kind: output, shape index: {}]
  %s7 = sld [smem:[#allocation0]]
  $region34: #{tpu_custom_call.1} parent=0
    _
  %s9 = ssub.s32 1, %s7
  %s10 = scalar_select 0, %s9, %s7
  $region1: #{tpu_custom_call.1} parent=0
    #allocation2 [shape = 'u8[4096]{0}', space=vmem, size = 0x1000, scoped, tag = 'output window, operand 0, single buffered']
    #allocation3 [shape = 's32[1]{0}', space=sflag, size = 0x4, scoped, tag = 'scoped memory for tpu_custom_call.1']
    %11 = vsyncpa [#allocation3], 0
    // Predicated region
    $region2: #{tpu_custom_call.1} parent=1 // pred_check
      _
    $region3: #{tpu_custom_call.1} parent=1 // pred_check_branch
      %13 = sbr.rel (0) target = $region5
    $region4: #{tpu_custom_call.1} parent=1 // pred_region
      _
    $region5: #{tpu_custom_call.1} parent=1 // pred_fallthru
      _
    // Predicated region
    $region6: #{tpu_custom_call.1} parent=1 // pred_check
      _
    $region7: #{tpu_custom_call.1} parent=1 // pred_check_branch
      %15 = sbr.rel (0) target = $region9
    $region8: #{tpu_custom_call.1} parent=1 // pred_region
      _
    $region9: #{tpu_custom_call.1} parent=1 // pred_fallthru
      _
    // Predicated region
    $region10: #{tpu_custom_call.1} parent=1 // pred_check
      _
    $region11: #{tpu_custom_call.1} parent=1 // pred_check_branch
      %17 = sbr.rel (0) target = $region13
    $region12: #{tpu_custom_call.1} parent=1 // pred_region
      _
    $region13: #{tpu_custom_call.1} parent=1 // pred_fallthru
      _
    // Predicated region
    $region14: #{tpu_custom_call.1} parent=1 // pred_check
      _
    $region15: #{tpu_custom_call.1} parent=1 // pred_check_branch
      %19 = sbr.rel (0) target = $region17
    $region16: #{tpu_custom_call.1} parent=1 // pred_region
      _
    $region17: #{tpu_custom_call.1} parent=1 // pred_fallthru
      _
    // Predicated region
    $region18: #{tpu_custom_call.1} parent=1 // pred_check
      _
    $region19: #{tpu_custom_call.1} parent=1 // pred_check_branch
      %21 = sbr.rel (0) target = $region21
    $region20: #{tpu_custom_call.1} parent=1 // pred_region
      _
    $region21: #{tpu_custom_call.1} parent=1 // pred_fallthru
      _
    // Predicated region
    $region22: #{tpu_custom_call.1} parent=1 // pred_check
      _
    $region23: #{tpu_custom_call.1} parent=1 // pred_check_branch
      %23 = sbr.rel (0) target = $region25
    $region24: #{tpu_custom_call.1} parent=1 // pred_region
      _
    $region25: #{tpu_custom_call.1} parent=1 // pred_fallthru
      _
    %v24 = vld [vmem:[%s0] sm:$0xff]
    %v25 = vld [vmem:[%s1] sm:$0x1]
    %v26 = vld [vmem:[%s2] sm:$0xff]
    %v27 = vld [vmem:[%s2 + $0x8] sm:$0xff]
    %v28 = vld [vmem:[%s2 + $0x10] sm:$0xff]
    %v29 = vld [vmem:[%s2 + $0x18] sm:$0xff]
    %v30 = vld [vmem:[%s3] sm:$0x1]
    %v31 = vld [vmem:[%s5] sm:$0x1]
    %v33 = vperm.slane %v31, 0
    %v35 = vadd.f32 %v33, 0.0
    %37 = vset.pattern.permute.xlu0 0
    %38 = vperm.xlu0 %37, %v24
    %v39 = vpop.permute.xlu0 %38
    %v42 = vperm.slane %v25, 0
    %v44 = vmul.f32 %v39, %v42
    %v46 = vperm.slane %v30, 0
    %v48 = vadd.f32 %v44, %v46
    %vm49 = vcmask 261120
    %v51 = vsel %vm49, 0.0, 0
    %53 = vmatpush.msra.mxu0 0.0
    %54 = vmatpush.msra.mxu0 0.0
    %55 = vmatpush.msra.mxu0 0.0
    %56 = vmatpush.msra.mxu0 0.0
    %57 = vmatpush.msra.mxu0 0.0
    %58 = vmatpush.msra.mxu0 0.0
    %59 = vmatpush.msra.mxu0 0.0
    %60 = vmatpush.msra.mxu0 0.0
    %61 = vmatpush.msra.mxu0 0.0
    %62 = vmatpush.msra.mxu0 0.0
    %63 = vmatpush.msra.mxu0 0.0
    %64 = vmatpush.msra.mxu0 0.0
    %65 = vmatpush.msra.mxu0 %v29
    %66 = vmatpush.msra.mxu0 %v28
    %67 = vmatpush.msra.mxu0 %v27
    %68 = vmatpush.msra.mxu0 %v26
    %69 = vmatmul.f32.gmra.mxu0 %v51
    %v70 = vpop.f32.mrf.mxu0
    %v71 = vadd.f32 0.0, %v70
    %72 = vdwg.mxu0
    %v73 = vadd.f32 %v48, %v71
    %v74 = vxor.u32 %v73, 2147483648
    %v75 = vmul.f32 %v74, 1.442695
    %v76 = vpow.pop %v75
    %v77 = vadd.f32 %v76, 1.0
    %v78 = vrcp.pop %v77
    %v79 = vmul.f32 %v77, %v78
    %v80 = vsub.f32 1.0, %v79
    %v81 = vmul.f32 %v78, %v80
    %v82 = vadd.f32 %v78, %v81
    %vm83 = vweird.f32 %v77
    %vm84 = vweird.f32 %v78
    %vm85 = vmor %vm83, %vm84
    %v86 = vsel %vm85, %v78, %v82
    %v87 = vand.u32 2147483647, %v77
    %vm88 = vcmp.eq.f32.partialorder %v87, 8.507059e+37
    %v89 = vand.u32 %v77, 2147483648
    %v90 = vor.u32 1.1754944e-38, %v89
    %v91 = vsel %vm88, %v90, %v86
    %v92 = vmul.f32 1.0, %v91
    %v93 = vtanh.pop %v73
    %v94 = vmul.f32 %v92, 0.0
    %96 = vrot.lane.b32.xlu0 %v93, 64
    %v97 = vpop.permute.xlu0 %96
    %v99 = vmul.f32 %v92, %v97
    %101 = vrot.lane.b32.xlu0 %v99, 32
    %v102 = vpop.permute.xlu0 %101
    %v104 = vadd.f32 %v94, %v102
    %v105 = vtanh.pop %v104
    %107 = vrot.lane.b32.xlu0 %v105, 64
    %v108 = vpop.permute.xlu0 %107
    %v110 = vmul.f32 %v92, %v108
    %v111 = vld [vmem:[%s4] sm:$0xff]
    %v112 = vld [vmem:[%s4 + $0x8] sm:$0xff]
    %v113 = vld [vmem:[%s4 + $0x10] sm:$0xff]
    %v114 = vld [vmem:[%s4 + $0x18] sm:$0xff]
    %116 = vrot.lane.b32.xlu0 %v110, 32
    %v117 = vpop.permute.xlu0 %116
    %v118 = vsel %vm49, %v117, 0
    %120 = vmatpush.msra.mxu0 0.0
    %121 = vmatpush.msra.mxu0 0.0
    %122 = vmatpush.msra.mxu0 0.0
    %123 = vmatpush.msra.mxu0 0.0
    %124 = vmatpush.msra.mxu0 0.0
    %125 = vmatpush.msra.mxu0 0.0
    %126 = vmatpush.msra.mxu0 0.0
    %127 = vmatpush.msra.mxu0 0.0
    %128 = vmatpush.msra.mxu0 0.0
    %129 = vmatpush.msra.mxu0 0.0
    %130 = vmatpush.msra.mxu0 0.0
    %131 = vmatpush.msra.mxu0 0.0
    %132 = vmatpush.msra.mxu0 %v114
    %133 = vmatpush.msra.mxu0 %v113
    %134 = vmatpush.msra.mxu0 %v112
    %135 = vmatpush.msra.mxu0 %v111
    %136 = vmatmul.f32.gmra.mxu0 %v118
    %v137 = vpop.f32.mrf.mxu0
    %v138 = vadd.f32 0.0, %v137
    %139 = vdwg.mxu0
    %v140 = vadd.f32 %v35, %v138
    %141 = vset.pattern.permute.xlu0 1
    %142 = vperm.xlu0 %141, %v24
    %v143 = vpop.permute.xlu0 %142
    %v145 = vmul.f32 %v143, %v42
    %v146 = vadd.f32 %v145, %v46
    %147 = vmatpush.msra.mxu0 0.0
    %148 = vmatpush.msra.mxu0 0.0
    %149 = vmatpush.msra.mxu0 0.0
    %150 = vmatpush.msra.mxu0 0.0
    %151 = vmatpush.msra.mxu0 0.0
    %152 = vmatpush.msra.mxu0 0.0
    %153 = vmatpush.msra.mxu0 0.0
    %154 = vmatpush.msra.mxu0 0.0
    %155 = vmatpush.msra.mxu0 0.0
    %156 = vmatpush.msra.mxu0 0.0
    %157 = vmatpush.msra.mxu0 0.0
    %158 = vmatpush.msra.mxu0 0.0
    %159 = vmatpush.msra.mxu0 %v29
    %160 = vmatpush.msra.mxu0 %v28
    %161 = vmatpush.msra.mxu0 %v27
    %162 = vmatpush.msra.mxu0 %v26
    %163 = vmatmul.f32.gmra.mxu0 %v118
    %v164 = vpop.f32.mrf.mxu0
    %v165 = vadd.f32 0.0, %v164
    %166 = vdwg.mxu0
    %v167 = vadd.f32 %v146, %v165
    %v168 = vxor.u32 %v167, 2147483648
    %v169 = vmul.f32 %v168, 1.442695
    %v170 = vpow.pop %v169
    %v171 = vadd.f32 %v170, 1.0
    %v172 = vrcp.pop %v171
    %v173 = vmul.f32 %v171, %v172
    %v174 = vsub.f32 1.0, %v173
    %v175 = vmul.f32 %v172, %v174
    %v176 = vadd.f32 %v172, %v175
    %vm177 = vweird.f32 %v171
    %vm178 = vweird.f32 %v172
    %vm179 = vmor %vm177, %vm178
    %v180 = vsel %vm179, %v172, %v176
    %v181 = vand.u32 2147483647, %v171
    %vm182 = vcmp.eq.f32.partialorder %v181, 8.507059e+37
    %v183 = vand.u32 %v171, 2147483648
    %v184 = vor.u32 1.1754944e-38, %v183
    %v185 = vsel %vm182, %v184, %v180
    %v186 = vmul.f32 1.0, %v185
    %v187 = vtanh.pop %v167
    %v188 = vmul.f32 %v186, %v104
    %190 = vrot.lane.b32.xlu0 %v187, 64
    %v191 = vpop.permute.xlu0 %190
    %v193 = vmul.f32 %v186, %v191
    %195 = vrot.lane.b32.xlu0 %v193, 32
    %v196 = vpop.permute.xlu0 %195
    %v198 = vadd.f32 %v188, %v196
    %v199 = vtanh.pop %v198
    %201 = vrot.lane.b32.xlu0 %v199, 64
    %v202 = vpop.permute.xlu0 %201
    %v204 = vmul.f32 %v186, %v202
    %s205 = scalar_lea.vmem %s4, 32
    %v206 = vld [vmem:[%s205] sm:$0xff]
    %v207 = vld [vmem:[%s205 + $0x8] sm:$0xff]
    %v208 = vld [vmem:[%s205 + $0x10] sm:$0xff]
    %v209 = vld [vmem:[%s205 + $0x18] sm:$0xff]
    %211 = vrot.lane.b32.xlu0 %v204, 32
    %v212 = vpop.permute.xlu0 %211
    %v213 = vsel %vm49, %v212, 0
    %215 = vmatpush.msra.mxu0 0.0
    %216 = vmatpush.msra.mxu0 0.0
    %217 = vmatpush.msra.mxu0 0.0
    %218 = vmatpush.msra.mxu0 0.0
    %219 = vmatpush.msra.mxu0 0.0
    %220 = vmatpush.msra.mxu0 0.0
    %221 = vmatpush.msra.mxu0 0.0
    %222 = vmatpush.msra.mxu0 0.0
    %223 = vmatpush.msra.mxu0 0.0
    %224 = vmatpush.msra.mxu0 0.0
    %225 = vmatpush.msra.mxu0 0.0
    %226 = vmatpush.msra.mxu0 0.0
    %227 = vmatpush.msra.mxu0 %v209
    %228 = vmatpush.msra.mxu0 %v208
    %229 = vmatpush.msra.mxu0 %v207
    %230 = vmatpush.msra.mxu0 %v206
    %231 = vmatmul.f32.gmra.mxu0 %v213
    %v232 = vpop.f32.mrf.mxu0
    %v233 = vadd.f32 0.0, %v232
    %234 = vdwg.mxu0
    %v235 = vadd.f32 %v140, %v233
    %236 = vset.pattern.permute.xlu0 2
    %237 = vperm.xlu0 %236, %v24
    %v238 = vpop.permute.xlu0 %237
    %v240 = vmul.f32 %v238, %v42
    %v241 = vadd.f32 %v240, %v46
    %242 = vmatpush.msra.mxu0 0.0
    %243 = vmatpush.msra.mxu0 0.0
    %244 = vmatpush.msra.mxu0 0.0
    %245 = vmatpush.msra.mxu0 0.0
    %246 = vmatpush.msra.mxu0 0.0
    %247 = vmatpush.msra.mxu0 0.0
    %248 = vmatpush.msra.mxu0 0.0
    %249 = vmatpush.msra.mxu0 0.0
    %250 = vmatpush.msra.mxu0 0.0
    %251 = vmatpush.msra.mxu0 0.0
    %252 = vmatpush.msra.mxu0 0.0
    %253 = vmatpush.msra.mxu0 0.0
    %254 = vmatpush.msra.mxu0 %v29
    %255 = vmatpush.msra.mxu0 %v28
    %256 = vmatpush.msra.mxu0 %v27
    %257 = vmatpush.msra.mxu0 %v26
    %258 = vmatmul.f32.gmra.mxu0 %v213
    %v259 = vpop.f32.mrf.mxu0
    %v260 = vadd.f32 0.0, %v259
    %261 = vdwg.mxu0
    %v262 = vadd.f32 %v241, %v260
    %v263 = vxor.u32 %v262, 2147483648
    %v264 = vmul.f32 %v263, 1.442695
    %v265 = vpow.pop %v264
    %v266 = vadd.f32 %v265, 1.0
    %v267 = vrcp.pop %v266
    %v268 = vmul.f32 %v266, %v267
    %v269 = vsub.f32 1.0, %v268
    %v270 = vmul.f32 %v267, %v269
    %v271 = vadd.f32 %v267, %v270
    %vm272 = vweird.f32 %v266
    %vm273 = vweird.f32 %v267
    %vm274 = vmor %vm272, %vm273
    %v275 = vsel %vm274, %v267, %v271
    %v276 = vand.u32 2147483647, %v266
    %vm277 = vcmp.eq.f32.partialorder %v276, 8.507059e+37
    %v278 = vand.u32 %v266, 2147483648
    %v279 = vor.u32 1.1754944e-38, %v278
    %v280 = vsel %vm277, %v279, %v275
    %v281 = vmul.f32 1.0, %v280
    %v282 = vtanh.pop %v262
    %v283 = vmul.f32 %v281, %v198
    %285 = vrot.lane.b32.xlu0 %v282, 64
    %v286 = vpop.permute.xlu0 %285
    %v288 = vmul.f32 %v281, %v286
    %290 = vrot.lane.b32.xlu0 %v288, 32
    %v291 = vpop.permute.xlu0 %290
    %v293 = vadd.f32 %v283, %v291
    %v294 = vtanh.pop %v293
    %296 = vrot.lane.b32.xlu0 %v294, 64
    %v297 = vpop.permute.xlu0 %296
    %v299 = vmul.f32 %v281, %v297
    %s300 = scalar_lea.vmem %s4, 64
    %v301 = vld [vmem:[%s300] sm:$0xff]
    %v302 = vld [vmem:[%s300 + $0x8] sm:$0xff]
    %v303 = vld [vmem:[%s300 + $0x10] sm:$0xff]
    %v304 = vld [vmem:[%s300 + $0x18] sm:$0xff]
    %306 = vrot.lane.b32.xlu0 %v299, 32
    %v307 = vpop.permute.xlu0 %306
    %v308 = vsel %vm49, %v307, 0
    %310 = vmatpush.msra.mxu0 0.0
    %311 = vmatpush.msra.mxu0 0.0
    %312 = vmatpush.msra.mxu0 0.0
    %313 = vmatpush.msra.mxu0 0.0
    %314 = vmatpush.msra.mxu0 0.0
    %315 = vmatpush.msra.mxu0 0.0
    %316 = vmatpush.msra.mxu0 0.0
    %317 = vmatpush.msra.mxu0 0.0
    %318 = vmatpush.msra.mxu0 0.0
    %319 = vmatpush.msra.mxu0 0.0
    %320 = vmatpush.msra.mxu0 0.0
    %321 = vmatpush.msra.mxu0 0.0
    %322 = vmatpush.msra.mxu0 %v304
    %323 = vmatpush.msra.mxu0 %v303
    %324 = vmatpush.msra.mxu0 %v302
    %325 = vmatpush.msra.mxu0 %v301
    %326 = vmatmul.f32.gmra.mxu0 %v308
    %v327 = vpop.f32.mrf.mxu0
    %v328 = vadd.f32 0.0, %v327
    %329 = vdwg.mxu0
    %v330 = vadd.f32 %v235, %v328
    %331 = vset.pattern.permute.xlu0 3
    %332 = vperm.xlu0 %331, %v24
    %v333 = vpop.permute.xlu0 %332
    %v335 = vmul.f32 %v333, %v42
    %v336 = vadd.f32 %v335, %v46
    %337 = vmatpush.msra.mxu0 0.0
    %338 = vmatpush.msra.mxu0 0.0
    %339 = vmatpush.msra.mxu0 0.0
    %340 = vmatpush.msra.mxu0 0.0
    %341 = vmatpush.msra.mxu0 0.0
    %342 = vmatpush.msra.mxu0 0.0
    %343 = vmatpush.msra.mxu0 0.0
    %344 = vmatpush.msra.mxu0 0.0
    %345 = vmatpush.msra.mxu0 0.0
    %346 = vmatpush.msra.mxu0 0.0
    %347 = vmatpush.msra.mxu0 0.0
    %348 = vmatpush.msra.mxu0 0.0
    %349 = vmatpush.msra.mxu0 %v29
    %350 = vmatpush.msra.mxu0 %v28
    %351 = vmatpush.msra.mxu0 %v27
    %352 = vmatpush.msra.mxu0 %v26
    %353 = vmatmul.f32.gmra.mxu0 %v308
    %v354 = vpop.f32.mrf.mxu0
    %v355 = vadd.f32 0.0, %v354
    %356 = vdwg.mxu0
    %v357 = vadd.f32 %v336, %v355
    %v358 = vxor.u32 %v357, 2147483648
    %v359 = vmul.f32 %v358, 1.442695
    %v360 = vpow.pop %v359
    %v361 = vadd.f32 %v360, 1.0
    %v362 = vrcp.pop %v361
    %v363 = vmul.f32 %v361, %v362
    %v364 = vsub.f32 1.0, %v363
    %v365 = vmul.f32 %v362, %v364
    %v366 = vadd.f32 %v362, %v365
    %vm367 = vweird.f32 %v361
    %vm368 = vweird.f32 %v362
    %vm369 = vmor %vm367, %vm368
    %v370 = vsel %vm369, %v362, %v366
    %v371 = vand.u32 2147483647, %v361
    %vm372 = vcmp.eq.f32.partialorder %v371, 8.507059e+37
    %v373 = vand.u32 %v361, 2147483648
    %v374 = vor.u32 1.1754944e-38, %v373
    %v375 = vsel %vm372, %v374, %v370
    %v376 = vmul.f32 1.0, %v375
    %v377 = vtanh.pop %v357
    %v378 = vmul.f32 %v376, %v293
    %380 = vrot.lane.b32.xlu0 %v377, 64
    %v381 = vpop.permute.xlu0 %380
    %v383 = vmul.f32 %v376, %v381
    %385 = vrot.lane.b32.xlu0 %v383, 32
    %v386 = vpop.permute.xlu0 %385
    %v388 = vadd.f32 %v378, %v386
    %v389 = vtanh.pop %v388
    %391 = vrot.lane.b32.xlu0 %v389, 64
    %v392 = vpop.permute.xlu0 %391
    %v394 = vmul.f32 %v376, %v392
    %s395 = scalar_lea.vmem %s4, 96
    %v396 = vld [vmem:[%s395] sm:$0xff]
    %v397 = vld [vmem:[%s395 + $0x8] sm:$0xff]
    %v398 = vld [vmem:[%s395 + $0x10] sm:$0xff]
    %v399 = vld [vmem:[%s395 + $0x18] sm:$0xff]
    %401 = vrot.lane.b32.xlu0 %v394, 32
    %v402 = vpop.permute.xlu0 %401
    %v403 = vsel %vm49, %v402, 0
    %405 = vmatpush.msra.mxu0 0.0
    %406 = vmatpush.msra.mxu0 0.0
    %407 = vmatpush.msra.mxu0 0.0
    %408 = vmatpush.msra.mxu0 0.0
    %409 = vmatpush.msra.mxu0 0.0
    %410 = vmatpush.msra.mxu0 0.0
    %411 = vmatpush.msra.mxu0 0.0
    %412 = vmatpush.msra.mxu0 0.0
    %413 = vmatpush.msra.mxu0 0.0
    %414 = vmatpush.msra.mxu0 0.0
    %415 = vmatpush.msra.mxu0 0.0
    %416 = vmatpush.msra.mxu0 0.0
    %417 = vmatpush.msra.mxu0 %v399
    %418 = vmatpush.msra.mxu0 %v398
    %419 = vmatpush.msra.mxu0 %v397
    %420 = vmatpush.msra.mxu0 %v396
    %421 = vmatmul.f32.gmra.mxu0 %v403
    %v422 = vpop.f32.mrf.mxu0
    %v423 = vadd.f32 0.0, %v422
    %424 = vdwg.mxu0
    %v425 = vadd.f32 %v330, %v423
    %426 = vset.pattern.permute.xlu0 4
    %427 = vperm.xlu0 %426, %v24
    %v428 = vpop.permute.xlu0 %427
    %v430 = vmul.f32 %v428, %v42
    %v431 = vadd.f32 %v430, %v46
    %432 = vmatpush.msra.mxu0 0.0
    %433 = vmatpush.msra.mxu0 0.0
    %434 = vmatpush.msra.mxu0 0.0
    %435 = vmatpush.msra.mxu0 0.0
    %436 = vmatpush.msra.mxu0 0.0
    %437 = vmatpush.msra.mxu0 0.0
    %438 = vmatpush.msra.mxu0 0.0
    %439 = vmatpush.msra.mxu0 0.0
    %440 = vmatpush.msra.mxu0 0.0
    %441 = vmatpush.msra.mxu0 0.0
    %442 = vmatpush.msra.mxu0 0.0
    %443 = vmatpush.msra.mxu0 0.0
    %444 = vmatpush.msra.mxu0 %v29
    %445 = vmatpush.msra.mxu0 %v28
    %446 = vmatpush.msra.mxu0 %v27
    %447 = vmatpush.msra.mxu0 %v26
    %448 = vmatmul.f32.gmra.mxu0 %v403
    %v449 = vpop.f32.mrf.mxu0
    %v450 = vadd.f32 0.0, %v449
    %451 = vdwg.mxu0
    %v452 = vadd.f32 %v431, %v450
    %v453 = vxor.u32 %v452, 2147483648
    %v454 = vmul.f32 %v453, 1.442695
    %v455 = vpow.pop %v454
    %v456 = vadd.f32 %v455, 1.0
    %v457 = vrcp.pop %v456
    %v458 = vmul.f32 %v456, %v457
    %v459 = vsub.f32 1.0, %v458
    %v460 = vmul.f32 %v457, %v459
    %v461 = vadd.f32 %v457, %v460
    %vm462 = vweird.f32 %v456
    %vm463 = vweird.f32 %v457
    %vm464 = vmor %vm462, %vm463
    %v465 = vsel %vm464, %v457, %v461
    %v466 = vand.u32 2147483647, %v456
    %vm467 = vcmp.eq.f32.partialorder %v466, 8.507059e+37
    %v468 = vand.u32 %v456, 2147483648
    %v469 = vor.u32 1.1754944e-38, %v468
    %v470 = vsel %vm467, %v469, %v465
    %v471 = vmul.f32 1.0, %v470
    %v472 = vtanh.pop %v452
    %v473 = vmul.f32 %v471, %v388
    %475 = vrot.lane.b32.xlu0 %v472, 64
    %v476 = vpop.permute.xlu0 %475
    %v478 = vmul.f32 %v471, %v476
    %480 = vrot.lane.b32.xlu0 %v478, 32
    %v481 = vpop.permute.xlu0 %480
    %v483 = vadd.f32 %v473, %v481
    %v484 = vtanh.pop %v483
    %486 = vrot.lane.b32.xlu0 %v484, 64
    %v487 = vpop.permute.xlu0 %486
    %v489 = vmul.f32 %v471, %v487
    %s490 = scalar_lea.vmem %s4, 128
    %v491 = vld [vmem:[%s490] sm:$0xff]
    %v492 = vld [vmem:[%s490 + $0x8] sm:$0xff]
    %v493 = vld [vmem:[%s490 + $0x10] sm:$0xff]
    %v494 = vld [vmem:[%s490 + $0x18] sm:$0xff]
    %496 = vrot.lane.b32.xlu0 %v489, 32
    %v497 = vpop.permute.xlu0 %496
    %v498 = vsel %vm49, %v497, 0
    %500 = vmatpush.msra.mxu0 0.0
    %501 = vmatpush.msra.mxu0 0.0
    %502 = vmatpush.msra.mxu0 0.0
    %503 = vmatpush.msra.mxu0 0.0
    %504 = vmatpush.msra.mxu0 0.0
    %505 = vmatpush.msra.mxu0 0.0
    %506 = vmatpush.msra.mxu0 0.0
    %507 = vmatpush.msra.mxu0 0.0
    %508 = vmatpush.msra.mxu0 0.0
    %509 = vmatpush.msra.mxu0 0.0
    %510 = vmatpush.msra.mxu0 0.0
    %511 = vmatpush.msra.mxu0 0.0
    %512 = vmatpush.msra.mxu0 %v494
    %513 = vmatpush.msra.mxu0 %v493
    %514 = vmatpush.msra.mxu0 %v492
    %515 = vmatpush.msra.mxu0 %v491
    %516 = vmatmul.f32.gmra.mxu0 %v498
    %v517 = vpop.f32.mrf.mxu0
    %v518 = vadd.f32 0.0, %v517
    %519 = vdwg.mxu0
    %v520 = vadd.f32 %v425, %v518
    %521 = vset.pattern.permute.xlu0 5
    %522 = vperm.xlu0 %521, %v24
    %v523 = vpop.permute.xlu0 %522
    %v525 = vmul.f32 %v523, %v42
    %v526 = vadd.f32 %v525, %v46
    %527 = vmatpush.msra.mxu0 0.0
    %528 = vmatpush.msra.mxu0 0.0
    %529 = vmatpush.msra.mxu0 0.0
    %530 = vmatpush.msra.mxu0 0.0
    %531 = vmatpush.msra.mxu0 0.0
    %532 = vmatpush.msra.mxu0 0.0
    %533 = vmatpush.msra.mxu0 0.0
    %534 = vmatpush.msra.mxu0 0.0
    %535 = vmatpush.msra.mxu0 0.0
    %536 = vmatpush.msra.mxu0 0.0
    %537 = vmatpush.msra.mxu0 0.0
    %538 = vmatpush.msra.mxu0 0.0
    %539 = vmatpush.msra.mxu0 %v29
    %540 = vmatpush.msra.mxu0 %v28
    %541 = vmatpush.msra.mxu0 %v27
    %542 = vmatpush.msra.mxu0 %v26
    %543 = vmatmul.f32.gmra.mxu0 %v498
    %v544 = vpop.f32.mrf.mxu0
    %v545 = vadd.f32 0.0, %v544
    %546 = vdwg.mxu0
    %v547 = vadd.f32 %v526, %v545
    %v548 = vxor.u32 %v547, 2147483648
    %v549 = vmul.f32 %v548, 1.442695
    %v550 = vpow.pop %v549
    %v551 = vadd.f32 %v550, 1.0
    %v552 = vrcp.pop %v551
    %v553 = vmul.f32 %v551, %v552
    %v554 = vsub.f32 1.0, %v553
    %v555 = vmul.f32 %v552, %v554
    %v556 = vadd.f32 %v552, %v555
    %vm557 = vweird.f32 %v551
    %vm558 = vweird.f32 %v552
    %vm559 = vmor %vm557, %vm558
    %v560 = vsel %vm559, %v552, %v556
    %v561 = vand.u32 2147483647, %v551
    %vm562 = vcmp.eq.f32.partialorder %v561, 8.507059e+37
    %v563 = vand.u32 %v551, 2147483648
    %v564 = vor.u32 1.1754944e-38, %v563
    %v565 = vsel %vm562, %v564, %v560
    %v566 = vmul.f32 1.0, %v565
    %v567 = vtanh.pop %v547
    %v568 = vmul.f32 %v566, %v483
    %570 = vrot.lane.b32.xlu0 %v567, 64
    %v571 = vpop.permute.xlu0 %570
    %v573 = vmul.f32 %v566, %v571
    %575 = vrot.lane.b32.xlu0 %v573, 32
    %v576 = vpop.permute.xlu0 %575
    %v578 = vadd.f32 %v568, %v576
    %v579 = vtanh.pop %v578
    %581 = vrot.lane.b32.xlu0 %v579, 64
    %v582 = vpop.permute.xlu0 %581
    %v584 = vmul.f32 %v566, %v582
    %s585 = scalar_lea.vmem %s4, 160
    %v586 = vld [vmem:[%s585] sm:$0xff]
    %v587 = vld [vmem:[%s585 + $0x8] sm:$0xff]
    %v588 = vld [vmem:[%s585 + $0x10] sm:$0xff]
    %v589 = vld [vmem:[%s585 + $0x18] sm:$0xff]
    %591 = vrot.lane.b32.xlu0 %v584, 32
    %v592 = vpop.permute.xlu0 %591
    %v593 = vsel %vm49, %v592, 0
    %595 = vmatpush.msra.mxu0 0.0
    %596 = vmatpush.msra.mxu0 0.0
    %597 = vmatpush.msra.mxu0 0.0
    %598 = vmatpush.msra.mxu0 0.0
    %599 = vmatpush.msra.mxu0 0.0
    %600 = vmatpush.msra.mxu0 0.0
    %601 = vmatpush.msra.mxu0 0.0
    %602 = vmatpush.msra.mxu0 0.0
    %603 = vmatpush.msra.mxu0 0.0
    %604 = vmatpush.msra.mxu0 0.0
    %605 = vmatpush.msra.mxu0 0.0
    %606 = vmatpush.msra.mxu0 0.0
    %607 = vmatpush.msra.mxu0 %v589
    %608 = vmatpush.msra.mxu0 %v588
    %609 = vmatpush.msra.mxu0 %v587
    %610 = vmatpush.msra.mxu0 %v586
    %611 = vmatmul.f32.gmra.mxu0 %v593
    %v612 = vpop.f32.mrf.mxu0
    %v613 = vadd.f32 0.0, %v612
    %614 = vdwg.mxu0
    %v615 = vadd.f32 %v520, %v613
    %616 = vset.pattern.permute.xlu0 6
    %617 = vperm.xlu0 %616, %v24
    %v618 = vpop.permute.xlu0 %617
    %v620 = vmul.f32 %v618, %v42
    %v621 = vadd.f32 %v620, %v46
    %622 = vmatpush.msra.mxu0 0.0
    %623 = vmatpush.msra.mxu0 0.0
    %624 = vmatpush.msra.mxu0 0.0
    %625 = vmatpush.msra.mxu0 0.0
    %626 = vmatpush.msra.mxu0 0.0
    %627 = vmatpush.msra.mxu0 0.0
    %628 = vmatpush.msra.mxu0 0.0
    %629 = vmatpush.msra.mxu0 0.0
    %630 = vmatpush.msra.mxu0 0.0
    %631 = vmatpush.msra.mxu0 0.0
    %632 = vmatpush.msra.mxu0 0.0
    %633 = vmatpush.msra.mxu0 0.0
    %634 = vmatpush.msra.mxu0 %v29
    %635 = vmatpush.msra.mxu0 %v28
    %636 = vmatpush.msra.mxu0 %v27
    %637 = vmatpush.msra.mxu0 %v26
    %638 = vmatmul.f32.gmra.mxu0 %v593
    %v639 = vpop.f32.mrf.mxu0
    %v640 = vadd.f32 0.0, %v639
    %641 = vdwg.mxu0
    %v642 = vadd.f32 %v621, %v640
    %v643 = vxor.u32 %v642, 2147483648
    %v644 = vmul.f32 %v643, 1.442695
    %v645 = vpow.pop %v644
    %v646 = vadd.f32 %v645, 1.0
    %v647 = vrcp.pop %v646
    %v648 = vmul.f32 %v646, %v647
    %v649 = vsub.f32 1.0, %v648
    %v650 = vmul.f32 %v647, %v649
    %v651 = vadd.f32 %v647, %v650
    %vm652 = vweird.f32 %v646
    %vm653 = vweird.f32 %v647
    %vm654 = vmor %vm652, %vm653
    %v655 = vsel %vm654, %v647, %v651
    %v656 = vand.u32 2147483647, %v646
    %vm657 = vcmp.eq.f32.partialorder %v656, 8.507059e+37
    %v658 = vand.u32 %v646, 2147483648
    %v659 = vor.u32 1.1754944e-38, %v658
    %v660 = vsel %vm657, %v659, %v655
    %v661 = vmul.f32 1.0, %v660
    %v662 = vtanh.pop %v642
    %v663 = vmul.f32 %v661, %v578
    %665 = vrot.lane.b32.xlu0 %v662, 64
    %v666 = vpop.permute.xlu0 %665
    %v668 = vmul.f32 %v661, %v666
    %670 = vrot.lane.b32.xlu0 %v668, 32
    %v671 = vpop.permute.xlu0 %670
    %v673 = vadd.f32 %v663, %v671
    %v674 = vtanh.pop %v673
    %676 = vrot.lane.b32.xlu0 %v674, 64
    %v677 = vpop.permute.xlu0 %676
    %v679 = vmul.f32 %v661, %v677
    %s680 = scalar_lea.vmem %s4, 192
    %v681 = vld [vmem:[%s680] sm:$0xff]
    %v682 = vld [vmem:[%s680 + $0x8] sm:$0xff]
    %v683 = vld [vmem:[%s680 + $0x10] sm:$0xff]
    %v684 = vld [vmem:[%s680 + $0x18] sm:$0xff]
    %686 = vrot.lane.b32.xlu0 %v679, 32
    %v687 = vpop.permute.xlu0 %686
    %v688 = vsel %vm49, %v687, 0
    %690 = vmatpush.msra.mxu0 0.0
    %691 = vmatpush.msra.mxu0 0.0
    %692 = vmatpush.msra.mxu0 0.0
    %693 = vmatpush.msra.mxu0 0.0
    %694 = vmatpush.msra.mxu0 0.0
    %695 = vmatpush.msra.mxu0 0.0
    %696 = vmatpush.msra.mxu0 0.0
    %697 = vmatpush.msra.mxu0 0.0
    %698 = vmatpush.msra.mxu0 0.0
    %699 = vmatpush.msra.mxu0 0.0
    %700 = vmatpush.msra.mxu0 0.0
    %701 = vmatpush.msra.mxu0 0.0
    %702 = vmatpush.msra.mxu0 %v684
    %703 = vmatpush.msra.mxu0 %v683
    %704 = vmatpush.msra.mxu0 %v682
    %705 = vmatpush.msra.mxu0 %v681
    %706 = vmatmul.f32.gmra.mxu0 %v688
    %v707 = vpop.f32.mrf.mxu0
    %v708 = vadd.f32 0.0, %v707
    %709 = vdwg.mxu0
    %v710 = vadd.f32 %v615, %v708
    %711 = vset.pattern.permute.xlu0 7
    %712 = vperm.xlu0 %711, %v24
    %v713 = vpop.permute.xlu0 %712
    %v715 = vmul.f32 %v713, %v42
    %v716 = vadd.f32 %v715, %v46
    %717 = vmatpush.msra.mxu0 0.0
    %718 = vmatpush.msra.mxu0 0.0
    %719 = vmatpush.msra.mxu0 0.0
    %720 = vmatpush.msra.mxu0 0.0
    %721 = vmatpush.msra.mxu0 0.0
    %722 = vmatpush.msra.mxu0 0.0
    %723 = vmatpush.msra.mxu0 0.0
    %724 = vmatpush.msra.mxu0 0.0
    %725 = vmatpush.msra.mxu0 0.0
    %726 = vmatpush.msra.mxu0 0.0
    %727 = vmatpush.msra.mxu0 0.0
    %728 = vmatpush.msra.mxu0 0.0
    %729 = vmatpush.msra.mxu0 %v29
    %730 = vmatpush.msra.mxu0 %v28
    %731 = vmatpush.msra.mxu0 %v27
    %732 = vmatpush.msra.mxu0 %v26
    %733 = vmatmul.f32.gmra.mxu0 %v688
    %v734 = vpop.f32.mrf.mxu0
    %v735 = vadd.f32 0.0, %v734
    %736 = vdwg.mxu0
    %v737 = vadd.f32 %v716, %v735
    %v738 = vxor.u32 %v737, 2147483648
    %v739 = vmul.f32 %v738, 1.442695
    %v740 = vpow.pop %v739
    %v741 = vadd.f32 %v740, 1.0
    %v742 = vrcp.pop %v741
    %v743 = vmul.f32 %v741, %v742
    %v744 = vsub.f32 1.0, %v743
    %v745 = vmul.f32 %v742, %v744
    %v746 = vadd.f32 %v742, %v745
    %vm747 = vweird.f32 %v741
    %vm748 = vweird.f32 %v742
    %vm749 = vmor %vm747, %vm748
    %v750 = vsel %vm749, %v742, %v746
    %v751 = vand.u32 2147483647, %v741
    %vm752 = vcmp.eq.f32.partialorder %v751, 8.507059e+37
    %v753 = vand.u32 %v741, 2147483648
    %v754 = vor.u32 1.1754944e-38, %v753
    %v755 = vsel %vm752, %v754, %v750
    %v756 = vmul.f32 1.0, %v755
    %v757 = vtanh.pop %v737
    %v758 = vmul.f32 %v756, %v673
    %760 = vrot.lane.b32.xlu0 %v757, 64
    %v761 = vpop.permute.xlu0 %760
    %v763 = vmul.f32 %v756, %v761
    %765 = vrot.lane.b32.xlu0 %v763, 32
    %v766 = vpop.permute.xlu0 %765
    %v768 = vadd.f32 %v758, %v766
    %v769 = vtanh.pop %v768
    %771 = vrot.lane.b32.xlu0 %v769, 64
    %v772 = vpop.permute.xlu0 %771
    %v774 = vmul.f32 %v756, %v772
    %s775 = scalar_lea.vmem %s4, 224
    %v776 = vld [vmem:[%s775] sm:$0xff]
    %v777 = vld [vmem:[%s775 + $0x8] sm:$0xff]
    %v778 = vld [vmem:[%s775 + $0x10] sm:$0xff]
    %v779 = vld [vmem:[%s775 + $0x18] sm:$0xff]
    %781 = vrot.lane.b32.xlu0 %v774, 32
    %v782 = vpop.permute.xlu0 %781
    %v783 = vsel %vm49, %v782, 0
    %785 = vmatpush.msra.mxu0 0.0
    %786 = vmatpush.msra.mxu0 0.0
    %787 = vmatpush.msra.mxu0 0.0
    %788 = vmatpush.msra.mxu0 0.0
    %789 = vmatpush.msra.mxu0 0.0
    %790 = vmatpush.msra.mxu0 0.0
    %791 = vmatpush.msra.mxu0 0.0
    %792 = vmatpush.msra.mxu0 0.0
    %793 = vmatpush.msra.mxu0 0.0
    %794 = vmatpush.msra.mxu0 0.0
    %795 = vmatpush.msra.mxu0 0.0
    %796 = vmatpush.msra.mxu0 0.0
    %797 = vmatpush.msra.mxu0 %v779
    %798 = vmatpush.msra.mxu0 %v778
    %799 = vmatpush.msra.mxu0 %v777
    %800 = vmatpush.msra.mxu0 %v776
    %801 = vmatmul.f32.gmra.mxu0 %v783
    %v802 = vpop.f32.mrf.mxu0
    %v803 = vadd.f32 0.0, %v802
    %804 = vdwg.mxu0
    %v805 = vadd.f32 %v710, %v803
    %806 = vset.pattern.permute.xlu0 8
    %807 = vperm.xlu0 %806, %v24
    %v808 = vpop.permute.xlu0 %807
    %v810 = vmul.f32 %v808, %v42
    %v811 = vadd.f32 %v810, %v46
    %812 = vmatpush.msra.mxu0 0.0
    %813 = vmatpush.msra.mxu0 0.0
    %814 = vmatpush.msra.mxu0 0.0
    %815 = vmatpush.msra.mxu0 0.0
    %816 = vmatpush.msra.mxu0 0.0
    %817 = vmatpush.msra.mxu0 0.0
    %818 = vmatpush.msra.mxu0 0.0
    %819 = vmatpush.msra.mxu0 0.0
    %820 = vmatpush.msra.mxu0 0.0
    %821 = vmatpush.msra.mxu0 0.0
    %822 = vmatpush.msra.mxu0 0.0
    %823 = vmatpush.msra.mxu0 0.0
    %824 = vmatpush.msra.mxu0 %v29
    %825 = vmatpush.msra.mxu0 %v28
    %826 = vmatpush.msra.mxu0 %v27
    %827 = vmatpush.msra.mxu0 %v26
    %828 = vmatmul.f32.gmra.mxu0 %v783
    %v829 = vpop.f32.mrf.mxu0
    %v830 = vadd.f32 0.0, %v829
    %831 = vdwg.mxu0
    %v832 = vadd.f32 %v811, %v830
    %v833 = vxor.u32 %v832, 2147483648
    %v834 = vmul.f32 %v833, 1.442695
    %v835 = vpow.pop %v834
    %v836 = vadd.f32 %v835, 1.0
    %v837 = vrcp.pop %v836
    %v838 = vmul.f32 %v836, %v837
    %v839 = vsub.f32 1.0, %v838
    %v840 = vmul.f32 %v837, %v839
    %v841 = vadd.f32 %v837, %v840
    %vm842 = vweird.f32 %v836
    %vm843 = vweird.f32 %v837
    %vm844 = vmor %vm842, %vm843
    %v845 = vsel %vm844, %v837, %v841
    %v846 = vand.u32 2147483647, %v836
    %vm847 = vcmp.eq.f32.partialorder %v846, 8.507059e+37
    %v848 = vand.u32 %v836, 2147483648
    %v849 = vor.u32 1.1754944e-38, %v848
    %v850 = vsel %vm847, %v849, %v845
    %v851 = vmul.f32 1.0, %v850
    %v852 = vtanh.pop %v832
    %v853 = vmul.f32 %v851, %v768
    %855 = vrot.lane.b32.xlu0 %v852, 64
    %v856 = vpop.permute.xlu0 %855
    %v858 = vmul.f32 %v851, %v856
    %860 = vrot.lane.b32.xlu0 %v858, 32
    %v861 = vpop.permute.xlu0 %860
    %v863 = vadd.f32 %v853, %v861
    %v864 = vtanh.pop %v863
    %866 = vrot.lane.b32.xlu0 %v864, 64
    %v867 = vpop.permute.xlu0 %866
    %v869 = vmul.f32 %v851, %v867
    %s870 = scalar_lea.vmem %s4, 256
    %v871 = vld [vmem:[%s870] sm:$0xff]
    %v872 = vld [vmem:[%s870 + $0x8] sm:$0xff]
    %v873 = vld [vmem:[%s870 + $0x10] sm:$0xff]
    %v874 = vld [vmem:[%s870 + $0x18] sm:$0xff]
    %876 = vrot.lane.b32.xlu0 %v869, 32
    %v877 = vpop.permute.xlu0 %876
    %v878 = vsel %vm49, %v877, 0
    %880 = vmatpush.msra.mxu0 0.0
    %881 = vmatpush.msra.mxu0 0.0
    %882 = vmatpush.msra.mxu0 0.0
    %883 = vmatpush.msra.mxu0 0.0
    %884 = vmatpush.msra.mxu0 0.0
    %885 = vmatpush.msra.mxu0 0.0
    %886 = vmatpush.msra.mxu0 0.0
    %887 = vmatpush.msra.mxu0 0.0
    %888 = vmatpush.msra.mxu0 0.0
    %889 = vmatpush.msra.mxu0 0.0
    %890 = vmatpush.msra.mxu0 0.0
    %891 = vmatpush.msra.mxu0 0.0
    %892 = vmatpush.msra.mxu0 %v874
    %893 = vmatpush.msra.mxu0 %v873
    %894 = vmatpush.msra.mxu0 %v872
    %895 = vmatpush.msra.mxu0 %v871
    %896 = vmatmul.f32.gmra.mxu0 %v878
    %v897 = vpop.f32.mrf.mxu0
    %v898 = vadd.f32 0.0, %v897
    %899 = vdwg.mxu0
    %v900 = vadd.f32 %v805, %v898
    %901 = vset.pattern.permute.xlu0 9
    %902 = vperm.xlu0 %901, %v24
    %v903 = vpop.permute.xlu0 %902
    %v905 = vmul.f32 %v903, %v42
    %v906 = vadd.f32 %v905, %v46
    %907 = vmatpush.msra.mxu0 0.0
    %908 = vmatpush.msra.mxu0 0.0
    %909 = vmatpush.msra.mxu0 0.0
    %910 = vmatpush.msra.mxu0 0.0
    %911 = vmatpush.msra.mxu0 0.0
    %912 = vmatpush.msra.mxu0 0.0
    %913 = vmatpush.msra.mxu0 0.0
    %914 = vmatpush.msra.mxu0 0.0
    %915 = vmatpush.msra.mxu0 0.0
    %916 = vmatpush.msra.mxu0 0.0
    %917 = vmatpush.msra.mxu0 0.0
    %918 = vmatpush.msra.mxu0 0.0
    %919 = vmatpush.msra.mxu0 %v29
    %920 = vmatpush.msra.mxu0 %v28
    %921 = vmatpush.msra.mxu0 %v27
    %922 = vmatpush.msra.mxu0 %v26
    %923 = vmatmul.f32.gmra.mxu0 %v878
    %v924 = vpop.f32.mrf.mxu0
    %v925 = vadd.f32 0.0, %v924
    %926 = vdwg.mxu0
    %v927 = vadd.f32 %v906, %v925
    %v928 = vxor.u32 %v927, 2147483648
    %v929 = vmul.f32 %v928, 1.442695
    %v930 = vpow.pop %v929
    %v931 = vadd.f32 %v930, 1.0
    %v932 = vrcp.pop %v931
    %v933 = vmul.f32 %v931, %v932
    %v934 = vsub.f32 1.0, %v933
    %v935 = vmul.f32 %v932, %v934
    %v936 = vadd.f32 %v932, %v935
    %vm937 = vweird.f32 %v931
    %vm938 = vweird.f32 %v932
    %vm939 = vmor %vm937, %vm938
    %v940 = vsel %vm939, %v932, %v936
    %v941 = vand.u32 2147483647, %v931
    %vm942 = vcmp.eq.f32.partialorder %v941, 8.507059e+37
    %v943 = vand.u32 %v931, 2147483648
    %v944 = vor.u32 1.1754944e-38, %v943
    %v945 = vsel %vm942, %v944, %v940
    %v946 = vmul.f32 1.0, %v945
    %v947 = vtanh.pop %v927
    %v948 = vmul.f32 %v946, %v863
    %950 = vrot.lane.b32.xlu0 %v947, 64
    %v951 = vpop.permute.xlu0 %950
    %v953 = vmul.f32 %v946, %v951
    %955 = vrot.lane.b32.xlu0 %v953, 32
    %v956 = vpop.permute.xlu0 %955
    %v958 = vadd.f32 %v948, %v956
    %v959 = vtanh.pop %v958
    %961 = vrot.lane.b32.xlu0 %v959, 64
    %v962 = vpop.permute.xlu0 %961
    %v964 = vmul.f32 %v946, %v962
    %s965 = scalar_lea.vmem %s4, 288
    %v966 = vld [vmem:[%s965] sm:$0xff]
    %v967 = vld [vmem:[%s965 + $0x8] sm:$0xff]
    %v968 = vld [vmem:[%s965 + $0x10] sm:$0xff]
    %v969 = vld [vmem:[%s965 + $0x18] sm:$0xff]
    %971 = vrot.lane.b32.xlu0 %v964, 32
    %v972 = vpop.permute.xlu0 %971
    %v973 = vsel %vm49, %v972, 0
    %975 = vmatpush.msra.mxu0 0.0
    %976 = vmatpush.msra.mxu0 0.0
    %977 = vmatpush.msra.mxu0 0.0
    %978 = vmatpush.msra.mxu0 0.0
    %979 = vmatpush.msra.mxu0 0.0
    %980 = vmatpush.msra.mxu0 0.0
    %981 = vmatpush.msra.mxu0 0.0
    %982 = vmatpush.msra.mxu0 0.0
    %983 = vmatpush.msra.mxu0 0.0
    %984 = vmatpush.msra.mxu0 0.0
    %985 = vmatpush.msra.mxu0 0.0
    %986 = vmatpush.msra.mxu0 0.0
    %987 = vmatpush.msra.mxu0 %v969
    %988 = vmatpush.msra.mxu0 %v968
    %989 = vmatpush.msra.mxu0 %v967
    %990 = vmatpush.msra.mxu0 %v966
    %991 = vmatmul.f32.gmra.mxu0 %v973
    %v992 = vpop.f32.mrf.mxu0
    %v993 = vadd.f32 0.0, %v992
    %994 = vdwg.mxu0
    %v995 = vadd.f32 %v900, %v993
    %996 = vset.pattern.permute.xlu0 10
    %997 = vperm.xlu0 %996, %v24
    %v998 = vpop.permute.xlu0 %997
    %v1000 = vmul.f32 %v998, %v42
    %v1001 = vadd.f32 %v1000, %v46
    %1002 = vmatpush.msra.mxu0 0.0
    %1003 = vmatpush.msra.mxu0 0.0
    %1004 = vmatpush.msra.mxu0 0.0
    %1005 = vmatpush.msra.mxu0 0.0
    %1006 = vmatpush.msra.mxu0 0.0
    %1007 = vmatpush.msra.mxu0 0.0
    %1008 = vmatpush.msra.mxu0 0.0
    %1009 = vmatpush.msra.mxu0 0.0
    %1010 = vmatpush.msra.mxu0 0.0
    %1011 = vmatpush.msra.mxu0 0.0
    %1012 = vmatpush.msra.mxu0 0.0
    %1013 = vmatpush.msra.mxu0 0.0
    %1014 = vmatpush.msra.mxu0 %v29
    %1015 = vmatpush.msra.mxu0 %v28
    %1016 = vmatpush.msra.mxu0 %v27
    %1017 = vmatpush.msra.mxu0 %v26
    %1018 = vmatmul.f32.gmra.mxu0 %v973
    %v1019 = vpop.f32.mrf.mxu0
    %v1020 = vadd.f32 0.0, %v1019
    %1021 = vdwg.mxu0
    %v1022 = vadd.f32 %v1001, %v1020
    %v1023 = vxor.u32 %v1022, 2147483648
    %v1024 = vmul.f32 %v1023, 1.442695
    %v1025 = vpow.pop %v1024
    %v1026 = vadd.f32 %v1025, 1.0
    %v1027 = vrcp.pop %v1026
    %v1028 = vmul.f32 %v1026, %v1027
    %v1029 = vsub.f32 1.0, %v1028
    %v1030 = vmul.f32 %v1027, %v1029
    %v1031 = vadd.f32 %v1027, %v1030
    %vm1032 = vweird.f32 %v1026
    %vm1033 = vweird.f32 %v1027
    %vm1034 = vmor %vm1032, %vm1033
    %v1035 = vsel %vm1034, %v1027, %v1031
    %v1036 = vand.u32 2147483647, %v1026
    %vm1037 = vcmp.eq.f32.partialorder %v1036, 8.507059e+37
    %v1038 = vand.u32 %v1026, 2147483648
    %v1039 = vor.u32 1.1754944e-38, %v1038
    %v1040 = vsel %vm1037, %v1039, %v1035
    %v1041 = vmul.f32 1.0, %v1040
    %v1042 = vtanh.pop %v1022
    %v1043 = vmul.f32 %v1041, %v958
    %1045 = vrot.lane.b32.xlu0 %v1042, 64
    %v1046 = vpop.permute.xlu0 %1045
    %v1048 = vmul.f32 %v1041, %v1046
    %1050 = vrot.lane.b32.xlu0 %v1048, 32
    %v1051 = vpop.permute.xlu0 %1050
    %v1053 = vadd.f32 %v1043, %v1051
    %v1054 = vtanh.pop %v1053
    %1056 = vrot.lane.b32.xlu0 %v1054, 64
    %v1057 = vpop.permute.xlu0 %1056
    %v1059 = vmul.f32 %v1041, %v1057
    %s1060 = scalar_lea.vmem %s4, 320
    %v1061 = vld [vmem:[%s1060] sm:$0xff]
    %v1062 = vld [vmem:[%s1060 + $0x8] sm:$0xff]
    %v1063 = vld [vmem:[%s1060 + $0x10] sm:$0xff]
    %v1064 = vld [vmem:[%s1060 + $0x18] sm:$0xff]
    %1066 = vrot.lane.b32.xlu0 %v1059, 32
    %v1067 = vpop.permute.xlu0 %1066
    %v1068 = vsel %vm49, %v1067, 0
    %1070 = vmatpush.msra.mxu0 0.0
    %1071 = vmatpush.msra.mxu0 0.0
    %1072 = vmatpush.msra.mxu0 0.0
    %1073 = vmatpush.msra.mxu0 0.0
    %1074 = vmatpush.msra.mxu0 0.0
    %1075 = vmatpush.msra.mxu0 0.0
    %1076 = vmatpush.msra.mxu0 0.0
    %1077 = vmatpush.msra.mxu0 0.0
    %1078 = vmatpush.msra.mxu0 0.0
    %1079 = vmatpush.msra.mxu0 0.0
    %1080 = vmatpush.msra.mxu0 0.0
    %1081 = vmatpush.msra.mxu0 0.0
    %1082 = vmatpush.msra.mxu0 %v1064
    %1083 = vmatpush.msra.mxu0 %v1063
    %1084 = vmatpush.msra.mxu0 %v1062
    %1085 = vmatpush.msra.mxu0 %v1061
    %1086 = vmatmul.f32.gmra.mxu0 %v1068
    %v1087 = vpop.f32.mrf.mxu0
    %v1088 = vadd.f32 0.0, %v1087
    %1089 = vdwg.mxu0
    %v1090 = vadd.f32 %v995, %v1088
    %1091 = vset.pattern.permute.xlu0 11
    %1092 = vperm.xlu0 %1091, %v24
    %v1093 = vpop.permute.xlu0 %1092
    %v1095 = vmul.f32 %v1093, %v42
    %v1096 = vadd.f32 %v1095, %v46
    %1097 = vmatpush.msra.mxu0 0.0
    %1098 = vmatpush.msra.mxu0 0.0
    %1099 = vmatpush.msra.mxu0 0.0
    %1100 = vmatpush.msra.mxu0 0.0
    %1101 = vmatpush.msra.mxu0 0.0
    %1102 = vmatpush.msra.mxu0 0.0
    %1103 = vmatpush.msra.mxu0 0.0
    %1104 = vmatpush.msra.mxu0 0.0
    %1105 = vmatpush.msra.mxu0 0.0
    %1106 = vmatpush.msra.mxu0 0.0
    %1107 = vmatpush.msra.mxu0 0.0
    %1108 = vmatpush.msra.mxu0 0.0
    %1109 = vmatpush.msra.mxu0 %v29
    %1110 = vmatpush.msra.mxu0 %v28
    %1111 = vmatpush.msra.mxu0 %v27
    %1112 = vmatpush.msra.mxu0 %v26
    %1113 = vmatmul.f32.gmra.mxu0 %v1068
    %v1114 = vpop.f32.mrf.mxu0
    %v1115 = vadd.f32 0.0, %v1114
    %1116 = vdwg.mxu0
    %v1117 = vadd.f32 %v1096, %v1115
    %v1118 = vxor.u32 %v1117, 2147483648
    %v1119 = vmul.f32 %v1118, 1.442695
    %v1120 = vpow.pop %v1119
    %v1121 = vadd.f32 %v1120, 1.0
    %v1122 = vrcp.pop %v1121
    %v1123 = vmul.f32 %v1121, %v1122
    %v1124 = vsub.f32 1.0, %v1123
    %v1125 = vmul.f32 %v1122, %v1124
    %v1126 = vadd.f32 %v1122, %v1125
    %vm1127 = vweird.f32 %v1121
    %vm1128 = vweird.f32 %v1122
    %vm1129 = vmor %vm1127, %vm1128
    %v1130 = vsel %vm1129, %v1122, %v1126
    %v1131 = vand.u32 2147483647, %v1121
    %vm1132 = vcmp.eq.f32.partialorder %v1131, 8.507059e+37
    %v1133 = vand.u32 %v1121, 2147483648
    %v1134 = vor.u32 1.1754944e-38, %v1133
    %v1135 = vsel %vm1132, %v1134, %v1130
    %v1136 = vmul.f32 1.0, %v1135
    %v1137 = vtanh.pop %v1117
    %v1138 = vmul.f32 %v1136, %v1053
    %1140 = vrot.lane.b32.xlu0 %v1137, 64
    %v1141 = vpop.permute.xlu0 %1140
    %v1143 = vmul.f32 %v1136, %v1141
    %1145 = vrot.lane.b32.xlu0 %v1143, 32
    %v1146 = vpop.permute.xlu0 %1145
    %v1148 = vadd.f32 %v1138, %v1146
    %v1149 = vtanh.pop %v1148
    %1151 = vrot.lane.b32.xlu0 %v1149, 64
    %v1152 = vpop.permute.xlu0 %1151
    %v1154 = vmul.f32 %v1136, %v1152
    %s1155 = scalar_lea.vmem %s4, 352
    %v1156 = vld [vmem:[%s1155] sm:$0xff]
    %v1157 = vld [vmem:[%s1155 + $0x8] sm:$0xff]
    %v1158 = vld [vmem:[%s1155 + $0x10] sm:$0xff]
    %v1159 = vld [vmem:[%s1155 + $0x18] sm:$0xff]
    %1161 = vrot.lane.b32.xlu0 %v1154, 32
    %v1162 = vpop.permute.xlu0 %1161
    %v1163 = vsel %vm49, %v1162, 0
    %1165 = vmatpush.msra.mxu0 0.0
    %1166 = vmatpush.msra.mxu0 0.0
    %1167 = vmatpush.msra.mxu0 0.0
    %1168 = vmatpush.msra.mxu0 0.0
    %1169 = vmatpush.msra.mxu0 0.0
    %1170 = vmatpush.msra.mxu0 0.0
    %1171 = vmatpush.msra.mxu0 0.0
    %1172 = vmatpush.msra.mxu0 0.0
    %1173 = vmatpush.msra.mxu0 0.0
    %1174 = vmatpush.msra.mxu0 0.0
    %1175 = vmatpush.msra.mxu0 0.0
    %1176 = vmatpush.msra.mxu0 0.0
    %1177 = vmatpush.msra.mxu0 %v1159
    %1178 = vmatpush.msra.mxu0 %v1158
    %1179 = vmatpush.msra.mxu0 %v1157
    %1180 = vmatpush.msra.mxu0 %v1156
    %1181 = vmatmul.f32.gmra.mxu0 %v1163
    %v1182 = vpop.f32.mrf.mxu0
    %v1183 = vadd.f32 0.0, %v1182
    %1184 = vdwg.mxu0
    %v1185 = vadd.f32 %v1090, %v1183
    %vm1186 = vcmask 48128
    %1187 = vst.msk [vmem:[#allocation2] sm:$0xff] %vm1186, %v1185
    // Predicated region
    $region26: #{tpu_custom_call.1} parent=1 // pred_check
      _
    $region27: #{tpu_custom_call.1} parent=1 // pred_check_branch
      %1189 = sbr.rel (0) target = $region29
    $region28: #{tpu_custom_call.1} parent=1 // pred_region
      %1191 = vsyncadd [#allocation3], 0
      %s1193 = sshll.u32 [#allocation2], 4
      %s1194 = int_to_ptr.vmem [resolvable:$true] %s1193
      %s1195 = sshll.u32 %s6, 4
      %s1196 = int_to_ptr.hbm [resolvable:$true] %s1195
      %1198 = dma.vmem_to_hbm [thread:$0]  %s1194, 128, %s1196, [#allocation3]
    $region29: #{tpu_custom_call.1} parent=1 // pred_fallthru
      _
    // Predicated region
    $region30: #{tpu_custom_call.1} parent=1 // pred_check
      _
    $region31: #{tpu_custom_call.1} parent=1 // pred_check_branch
      %1200 = sbr.rel (0) target = $region33
    $region32: #{tpu_custom_call.1} parent=1 // pred_region
      %1202 = dma.done [#allocation3], 128
    $region33: #{tpu_custom_call.1} parent=1 // pred_fallthru
      _
    %1203 = vsyncpa [#allocation3], 1

</llo_original>
